<compile_context>
chip_gen: v7x
topology: tpu7x:2x2x1
jax: 0.10.0
libtpu: 0.0.40
codegen_flags: <defaults>
</compile_context>

<pallas_src>
import numpy as np
import jax
import jax.numpy as jnp
from jax.experimental import pallas as pl
from jax.experimental.pallas import tpu as pltpu

INPUT_NODES = [1, 2, 3]          # matches the reference script
N_IN = sum(INPUT_NODES)          # 6 raw input scalars per sample
K_DIM = 16                       # packed activation width (one bf16 row-tile)
CONST_LANE = K_DIM - 1           # lane 15 carries the constant 1.0 (bias row)
LANES = 128                      # lane width of the fused weight tiles
N_LAYERS = 6                     # 3 fused branch layers + 3 head layers


# ----------------------------------------------------------------------------
# Pallas kernel: entire forward for a (TB,) tile of samples (6 bf16 MXU matmuls).
# ----------------------------------------------------------------------------
def classifier_kernel(x_ref,     # (TB, 16)      f32  packed inputs (lane 15 == 1.0)
                      w_ref,     # (6, 16, 128)  bf16 fused layers (biases folded)
                      o_ref):    # (TB, 128)     f32  lane-dense output slab
    h = x_ref[...]                                            # (TB, 16) f32
    for i in range(N_LAYERS - 1):
        z = jnp.dot(h.astype(jnp.bfloat16), w_ref[i],
                    preferred_element_type=jnp.float32)       # (TB, 128) f32, MXU
        h = jnp.maximum(z[:, :K_DIM], 0.0)                    # ReLU; keep packed lanes
    z = jnp.dot(h.astype(jnp.bfloat16), w_ref[N_LAYERS - 1],
                preferred_element_type=jnp.float32)           # head fc_out
    o_ref[...] = jax.nn.sigmoid(z)                            # column 0 is the result


# ----------------------------------------------------------------------------
# Parameter construction (PyTorch nn.Linear-style init, bf16-representable).
# ----------------------------------------------------------------------------
def init_linear(key, fan_in, fan_out):
    """Returns (W_t, b) with W_t stored transposed as (fan_in, fan_out).
    Values rounded to bf16-representable so kernel (bf16 MXU) and reference use
    bit-identical parameters."""
    kw, kb = jax.random.split(key)
    bound = 1.0 / np.sqrt(fan_in)
    w_t = jax.random.uniform(kw, (fan_in, fan_out), jnp.float32, -bound, bound)
    b = jax.random.uniform(kb, (fan_out,), jnp.float32, -bound, bound)
    q = lambda a: jnp.asarray(a, jnp.bfloat16).astype(jnp.float32)
    return q(w_t), q(b)


def fuse_layer(ws, bs, in_offs, out_offs):
    """Pack per-branch (in,out) weights block-diagonally into one (16,128) tile.
    Biases fold into row CONST_LANE; W[CONST_LANE, CONST_LANE] = 1 keeps the
    constant-1 lane alive through ReLU for the next layer's bias.
    Blocks reach row/col index 11 at most, so lane 15 never collides."""
    W = np.zeros((K_DIM, LANES), np.float32)
    for w, b, io, oo in zip(ws, bs, in_offs, out_offs):
        w = np.asarray(w)
        b = np.asarray(b)
        fi, fo = w.shape
        W[io:io + fi, oo:oo + fo] = w
        W[CONST_LANE, oo:oo + fo] = b
    W[CONST_LANE, CONST_LANE] = 1.0
    return W


def build_params(key):
    keys = jax.random.split(key, 3 * len(INPUT_NODES) + 3)
    ki = iter(range(len(keys)))

    branch = []
    for n in INPUT_NODES:
        w1, b1 = init_linear(keys[next(ki)], n, 2 * n)
        w2, b2 = init_linear(keys[next(ki)], 2 * n, n)
        w3, b3 = init_linear(keys[next(ki)], n, 1)
        branch.append((w1, b1, w2, b2, w3, b3))

    nodes = len(INPUT_NODES)
    wc1, bc1 = init_linear(keys[next(ki)], nodes, 2 * nodes)
    wc2, bc2 = init_linear(keys[next(ki)], 2 * nodes, nodes)
    wco, bco = init_linear(keys[next(ki)], nodes, 1)
    raw = {"branch": branch, "head": (wc1, bc1, wc2, bc2, wco, bco)}

    in_offs = [0, 1, 3]    # cumulative offsets of branch input sizes [1,2,3]
    hid_offs = [0, 2, 6]   # cumulative offsets of branch hidden sizes [2,4,6]
    layers = [
        fuse_layer([b[0] for b in branch], [b[1] for b in branch], in_offs, hid_offs),
        fuse_layer([b[2] for b in branch], [b[3] for b in branch], hid_offs, in_offs),
        fuse_layer([b[4] for b in branch], [b[5] for b in branch], in_offs, [0, 1, 2]),
        fuse_layer([wc1], [bc1], [0], [0]),
        fuse_layer([wc2], [bc2], [0], [0]),
        fuse_layer([wco], [bco], [0], [0]),
    ]
    W = jnp.asarray(np.stack(layers, axis=0), jnp.bfloat16)   # (6,16,128) = 24 KiB
    return raw, W


# ----------------------------------------------------------------------------
# Wrapper around pallas_call (batched; weights stay VMEM-resident).
# ----------------------------------------------------------------------------
def _round_up(n, m):
    return ((n + m - 1) // m) * m


def classifier_forward(inputs, W, *, tb=256):
    """inputs: list of 3 arrays, shapes (B,1),(B,2),(B,3) (or 1-D for B=1).
    Returns (B, 1) f32: row i is the module's sigmoid output for sample i."""
    xs = []
    for a in inputs:
        a = jnp.asarray(a, jnp.float32)
        xs.append(a[None, :] if a.ndim == 1 else a)
    B = xs[0].shape[0]

    # Packed activation: lanes 0..5 = concatenated branch inputs, lane 15 = 1.0.
    x6 = jnp.concatenate(xs, axis=1)                                    # (B, 6)
    x16 = jnp.concatenate(
        [x6,
         jnp.zeros((B, CONST_LANE - N_IN), jnp.float32),
         jnp.ones((B, 1), jnp.float32)], axis=1)                        # (B, 16)

    tb_eff = min(tb, _round_up(B, 8))          # sublane-aligned batch tile
    b_pad = _round_up(B, tb_eff)
    if b_pad != B:
        x16 = jnp.pad(x16, ((0, b_pad - B), (0, 0)))

    out = pl.pallas_call(
        classifier_kernel,
        out_shape=jax.ShapeDtypeStruct((b_pad, LANES), jnp.float32),
        grid_spec=pltpu.PrefetchScalarGridSpec(
            num_scalar_prefetch=0,
            grid=(b_pad // tb_eff,),
            in_specs=[
                pl.BlockSpec((tb_eff, K_DIM), lambda b: (b, 0)),            # stream
                pl.BlockSpec((N_LAYERS, K_DIM, LANES), lambda b: (0, 0, 0)),  # resident
            ],
            out_specs=pl.BlockSpec((tb_eff, LANES), lambda b: (b, 0)),
        ),
        compiler_params=pltpu.CompilerParams(
            dimension_semantics=("parallel",)),
    )(x16, W)
    return out[:B, 0:1]                                                  # (B, 1)


# ----------------------------------------------------------------------------
# Pure-JAX reference (mirrors the PyTorch forward; emulates the kernel's
# bf16-operand / f32-accumulate MXU semantics so tolerances stay tight).
# ----------------------------------------------------------------------------
def reference_forward(inputs, raw):
    def lin(h, w, b):
        return jnp.dot(h.astype(jnp.bfloat16), jnp.asarray(w, jnp.bfloat16),
                       preferred_element_type=jnp.float32) + b

    feats = []
    for i in range(len(INPUT_NODES)):
        w1, b1, w2, b2, w3, b3 = raw["branch"][i]
        h = jnp.maximum(lin(inputs[i].astype(jnp.float32), w1, b1), 0.0)
        h = jnp.maximum(lin(h, w2, b2), 0.0)
        h = jnp.maximum(lin(h, w3, b3), 0.0)   # relu(relu(.)) == relu(.)
        feats.append(h)
    x = jnp.concatenate(feats, axis=1)         # (B, 3) == torch.cat(x_list)
    wc1, bc1, wc2, bc2, wco, bco = raw["head"]
    x = jnp.maximum(lin(x, wc1, bc1), 0.0)
    x = jnp.maximum(lin(x, wc2, bc2), 0.0)
    return jax.nn.sigmoid(lin(x, wco, bco))    # (B, 1)


if __name__ == "__main__":
    key = jax.random.PRNGKey(0)
    k_params, k_in = jax.random.split(key)
    raw, W = build_params(k_params)

    # Deterministic example inputs: batch of 300 samples (non-multiple of the
    # 256-row tile to exercise padding + a 2-step grid), per-branch sizes 1,2,3.
    B = 300
    in_keys = jax.random.split(k_in, len(INPUT_NODES))
    inputs = [jax.random.normal(in_keys[i], (B, n), jnp.float32)
              for i, n in enumerate(INPUT_NODES)]

    fwd = jax.jit(classifier_forward)
    out = jax.block_until_ready(fwd(inputs, W))

    ref = reference_forward(inputs, raw)
    np.testing.assert_allclose(np.asarray(out), np.asarray(ref),
                               rtol=1e-3, atol=1e-5)

    print("KERNEL_OK")
</pallas_src>

<mosaic_0001>
module attributes {stable_mosaic.version = 11 : i64} {
  func.func @classifier_kernel(%arg0: i32, %arg1: memref<256x16xf32, #tpu.memory_space<vmem>>, %arg2: memref<6x16x128xbf16, #tpu.memory_space<vmem>>, %arg3: memref<256x128xf32, #tpu.memory_space<vmem>>) attributes {dimension_semantics = [#tpu.dimension_semantics<parallel>], iteration_bounds = array<i64: 2>, scalar_prefetch = 0 : i64, scratch_operands = 0 : i64, tpu.core_type = #tpu.core_type<tc>, window_params = [{transform_indices = @transform_0, window_bounds = array<i64: 256, 16>}, {pipeline_mode = #tpu.pipeline_mode<synchronous>, transform_indices = @transform_1, window_bounds = array<i64: 6, 16, 128>}, {transform_indices = @transform_2, window_bounds = array<i64: 256, 128>}]} {
    %c0 = arith.constant 0 : index
    %c0_0 = arith.constant 0 : index
    %0 = vector.load %arg1[%c0, %c0_0] : memref<256x16xf32, #tpu.memory_space<vmem>>, vector<256x16xf32>
    %1 = arith.truncf %0 : vector<256x16xf32> to vector<256x16xbf16>
    %c0_1 = arith.constant 0 : index
    %c0_2 = arith.constant 0 : index
    %c0_3 = arith.constant 0 : index
    %2 = vector.load %arg2[%c0_1, %c0_2, %c0_3] : memref<6x16x128xbf16, #tpu.memory_space<vmem>>, vector<1x16x128xbf16>
    %3 = vector.shape_cast %2 : vector<1x16x128xbf16> to vector<16x128xbf16>
    %cst = arith.constant dense<0.000000e+00> : vector<256x128xf32>
    %4 = tpu.matmul %1, %3, %cst {dimension_numbers = #tpu.dot_dimension_numbers<[1], [0], [0], [1], [0, 0, 1, 1], [], []>} : vector<256x16xbf16>, vector<16x128xbf16>, vector<256x128xf32> -> vector<256x128xf32>
    %5 = vector.extract_strided_slice %4 {offsets = [0, 0], sizes = [256, 16], strides = [1, 1]} : vector<256x128xf32> to vector<256x16xf32>
    %cst_4 = arith.constant 0.000000e+00 : f32
    %6 = vector.broadcast %cst_4 : f32 to vector<256x16xf32>
    %7 = arith.maximumf %5, %6 : vector<256x16xf32>
    %8 = arith.truncf %7 : vector<256x16xf32> to vector<256x16xbf16>
    %c1 = arith.constant 1 : index
    %c0_5 = arith.constant 0 : index
    %c0_6 = arith.constant 0 : index
    %9 = vector.load %arg2[%c1, %c0_5, %c0_6] : memref<6x16x128xbf16, #tpu.memory_space<vmem>>, vector<1x16x128xbf16>
    %10 = vector.shape_cast %9 : vector<1x16x128xbf16> to vector<16x128xbf16>
    %cst_7 = arith.constant dense<0.000000e+00> : vector<256x128xf32>
    %11 = tpu.matmul %8, %10, %cst_7 {dimension_numbers = #tpu.dot_dimension_numbers<[1], [0], [0], [1], [0, 0, 1, 1], [], []>} : vector<256x16xbf16>, vector<16x128xbf16>, vector<256x128xf32> -> vector<256x128xf32>
    %12 = vector.extract_strided_slice %11 {offsets = [0, 0], sizes = [256, 16], strides = [1, 1]} : vector<256x128xf32> to vector<256x16xf32>
    %cst_8 = arith.constant 0.000000e+00 : f32
    %13 = vector.broadcast %cst_8 : f32 to vector<256x16xf32>
    %14 = arith.maximumf %12, %13 : vector<256x16xf32>
    %15 = arith.truncf %14 : vector<256x16xf32> to vector<256x16xbf16>
    %c2 = arith.constant 2 : index
    %c0_9 = arith.constant 0 : index
    %c0_10 = arith.constant 0 : index
    %16 = vector.load %arg2[%c2, %c0_9, %c0_10] : memref<6x16x128xbf16, #tpu.memory_space<vmem>>, vector<1x16x128xbf16>
    %17 = vector.shape_cast %16 : vector<1x16x128xbf16> to vector<16x128xbf16>
    %cst_11 = arith.constant dense<0.000000e+00> : vector<256x128xf32>
    %18 = tpu.matmul %15, %17, %cst_11 {dimension_numbers = #tpu.dot_dimension_numbers<[1], [0], [0], [1], [0, 0, 1, 1], [], []>} : vector<256x16xbf16>, vector<16x128xbf16>, vector<256x128xf32> -> vector<256x128xf32>
    %19 = vector.extract_strided_slice %18 {offsets = [0, 0], sizes = [256, 16], strides = [1, 1]} : vector<256x128xf32> to vector<256x16xf32>
    %cst_12 = arith.constant 0.000000e+00 : f32
    %20 = vector.broadcast %cst_12 : f32 to vector<256x16xf32>
    %21 = arith.maximumf %19, %20 : vector<256x16xf32>
    %22 = arith.truncf %21 : vector<256x16xf32> to vector<256x16xbf16>
    %c3 = arith.constant 3 : index
    %c0_13 = arith.constant 0 : index
    %c0_14 = arith.constant 0 : index
    %23 = vector.load %arg2[%c3, %c0_13, %c0_14] : memref<6x16x128xbf16, #tpu.memory_space<vmem>>, vector<1x16x128xbf16>
    %24 = vector.shape_cast %23 : vector<1x16x128xbf16> to vector<16x128xbf16>
    %cst_15 = arith.constant dense<0.000000e+00> : vector<256x128xf32>
    %25 = tpu.matmul %22, %24, %cst_15 {dimension_numbers = #tpu.dot_dimension_numbers<[1], [0], [0], [1], [0, 0, 1, 1], [], []>} : vector<256x16xbf16>, vector<16x128xbf16>, vector<256x128xf32> -> vector<256x128xf32>
    %26 = vector.extract_strided_slice %25 {offsets = [0, 0], sizes = [256, 16], strides = [1, 1]} : vector<256x128xf32> to vector<256x16xf32>
    %cst_16 = arith.constant 0.000000e+00 : f32
    %27 = vector.broadcast %cst_16 : f32 to vector<256x16xf32>
    %28 = arith.maximumf %26, %27 : vector<256x16xf32>
    %29 = arith.truncf %28 : vector<256x16xf32> to vector<256x16xbf16>
    %c4 = arith.constant 4 : index
    %c0_17 = arith.constant 0 : index
    %c0_18 = arith.constant 0 : index
    %30 = vector.load %arg2[%c4, %c0_17, %c0_18] : memref<6x16x128xbf16, #tpu.memory_space<vmem>>, vector<1x16x128xbf16>
    %31 = vector.shape_cast %30 : vector<1x16x128xbf16> to vector<16x128xbf16>
    %cst_19 = arith.constant dense<0.000000e+00> : vector<256x128xf32>
    %32 = tpu.matmul %29, %31, %cst_19 {dimension_numbers = #tpu.dot_dimension_numbers<[1], [0], [0], [1], [0, 0, 1, 1], [], []>} : vector<256x16xbf16>, vector<16x128xbf16>, vector<256x128xf32> -> vector<256x128xf32>
    %33 = vector.extract_strided_slice %32 {offsets = [0, 0], sizes = [256, 16], strides = [1, 1]} : vector<256x128xf32> to vector<256x16xf32>
    %cst_20 = arith.constant 0.000000e+00 : f32
    %34 = vector.broadcast %cst_20 : f32 to vector<256x16xf32>
    %35 = arith.maximumf %33, %34 : vector<256x16xf32>
    %36 = arith.truncf %35 : vector<256x16xf32> to vector<256x16xbf16>
    %c5 = arith.constant 5 : index
    %c0_21 = arith.constant 0 : index
    %c0_22 = arith.constant 0 : index
    %37 = vector.load %arg2[%c5, %c0_21, %c0_22] : memref<6x16x128xbf16, #tpu.memory_space<vmem>>, vector<1x16x128xbf16>
    %38 = vector.shape_cast %37 : vector<1x16x128xbf16> to vector<16x128xbf16>
    %cst_23 = arith.constant dense<0.000000e+00> : vector<256x128xf32>
    %39 = tpu.matmul %36, %38, %cst_23 {dimension_numbers = #tpu.dot_dimension_numbers<[1], [0], [0], [1], [0, 0, 1, 1], [], []>} : vector<256x16xbf16>, vector<16x128xbf16>, vector<256x128xf32> -> vector<256x128xf32>
    %40 = arith.negf %39 : vector<256x128xf32>
    %41 = math.exp %40 : vector<256x128xf32>
    %cst_24 = arith.constant 1.000000e+00 : f32
    %42 = vector.broadcast %cst_24 : f32 to vector<256x128xf32>
    %43 = arith.addf %42, %41 : vector<256x128xf32>
    %44 = arith.divf %42, %43 : vector<256x128xf32>
    %c0_25 = arith.constant 0 : index
    %c0_26 = arith.constant 0 : index
    %45 = vector.load %arg3[%c0_25, %c0_26] : memref<256x128xf32, #tpu.memory_space<vmem>>, vector<256x128xf32>
    tpu.vector_store %arg3[%c0_25, %c0_26], %44 {strides = array<i32>} : memref<256x128xf32, #tpu.memory_space<vmem>>, vector<256x128xf32>,
    return
  }
  func.func @transform_0(%arg0: i32) -> (i32, i32) {
    %c0_i32 = arith.constant 0 : i32
    %c0_i32_0 = arith.constant 0 : i32
    return %arg0, %c0_i32 : i32, i32
  }
  func.func @transform_1(%arg0: i32) -> (i32, i32, i32) {
    %c0_i32 = arith.constant 0 : i32
    %c0_i32_0 = arith.constant 0 : i32
    %c0_i32_1 = arith.constant 0 : i32
    %c0_i32_2 = arith.constant 0 : i32
    return %c0_i32, %c0_i32_0, %c0_i32_1 : i32, i32, i32
  }
  func.func @transform_2(%arg0: i32) -> (i32, i32) {
    %c0_i32 = arith.constant 0 : i32
    %c0_i32_0 = arith.constant 0 : i32
    return %arg0, %c0_i32 : i32, i32
  }
}

</mosaic_0001>

<llo_original>
// kernel: classifier_forward.1
$region0: #{classifier_forward.1}
  #allocation0 [shape = 'u32[]', space=smem, size = 0x4, offset = 0x4, fixed_abs, tag = 'smem constant byte address 0x4 - core index']
  #allocation1 [shape = 'u32[144,128]{1,0:T(1,128)}', space=vmem, size = 0x12000, scoped, tag = 'internal scratch']
  %s0 = inlined_call_operand.vmem [shape: f32[512,16], index: 0, kind: input, shape index: {}]
  %s1 = inlined_call_operand.vmem [shape: bf16[6,16,128], index: 1, kind: input, shape index: {}]
  %s2 = inlined_call_operand.vmem [shape: f32[512,128], index: 2, kind: output, shape index: {}]
  %s3 = sld [smem:[#allocation0]]
  $region41: #{classifier_forward.1} parent=0
    _
  %s5 = ssub.s32 1, %s3
  %s6 = scalar_select 0, %s5, %s3
  loop: start=0, step=1, limit=4
  $region2: #{classifier_forward.1} parent=0 // loop_pre_header
    _
  $region3: #{classifier_forward.1} parent=0 // loop_header
    %s8 = sphi 0, %s12
    %p9 = scmp.ge.s32.totalorder %s8, 4
    %s18 = sphi 0, %s20
    %s21 = sphi 0, %s18
    %s22 = sphi 0, %s21
    %s38 = sphi 0, %s22
    %s42 = sphi 0, %s42
    %s44 = sphi 0, %s42
    %s45 = sphi 0, %s44
    %s59 = sphi 0, %s45
    %s65 = sphi 0, %s67
    %s68 = sphi 0, %s65
    %s69 = sphi 0, %s68
    %s85 = sphi 0, %s69
  $region4: #{classifier_forward.1} parent=0 // loop_header_branch
    %11 = sbr.rel (%p9) target = $region8
  $region5: #{classifier_forward.1} parent=0 // loop_body
    %s13 = ssub.s32 %s8, 1
    %s14 = ssub.s32 %s8, 2
    %s15 = sadd.s32 %s8, 1
    %s16 = ssub.s32 %s8, %s15
    %p17 = scmp.eq.s32.totalorder %s16, 0
    %s19 = sadd.s32 %s18, 1
    %s20 = scalar_select %p17, %s18, %s19
    %p23 = pneg %p17
    %p24 = scmp.eq.s32.totalorder %s8, 1
    %p25 = por %p23, %p24
    %p26 = scmp.ne.s32.totalorder %s18, %s21
    %p27 = scmp.eq.s32.totalorder %s8, 0
    %p28 = por %p26, %p27
    %p29 = scmp.ne.s32.totalorder %s18, %s21
    %p30 = scmp.eq.s32.totalorder %s13, 1
    %p31 = por %p29, %p30
    %p32 = scmp.ne.s32.totalorder %s21, %s22
    %p33 = scmp.eq.s32.totalorder %s13, 0
    %p34 = por %p32, %p33
    %p35 = scmp.ne.s32.totalorder %s21, %s22
    %p36 = scmp.eq.s32.totalorder %s14, 1
    %p37 = por %p35, %p36
    %p39 = scmp.ne.s32.totalorder %s22, %s38
    %p40 = scmp.eq.s32.totalorder %s14, 0
    %p41 = por %p39, %p40
    %s43 = sadd.s32 %s42, 1
    %p46 = scmp.eq.s32.totalorder %s8, 1
    %p47 = scmp.ne.s32.totalorder %s42, %s44
    %p48 = scmp.eq.s32.totalorder %s8, 0
    %p49 = por %p47, %p48
    %p50 = scmp.ne.s32.totalorder %s42, %s44
    %p51 = scmp.eq.s32.totalorder %s13, 1
    %p52 = por %p50, %p51
    %p53 = scmp.ne.s32.totalorder %s44, %s45
    %p54 = scmp.eq.s32.totalorder %s13, 0
    %p55 = por %p53, %p54
    %p56 = scmp.ne.s32.totalorder %s44, %s45
    %p57 = scmp.eq.s32.totalorder %s14, 1
    %p58 = por %p56, %p57
    %p60 = scmp.ne.s32.totalorder %s45, %s59
    %p61 = scmp.eq.s32.totalorder %s14, 0
    %p62 = por %p60, %p61
    %s63 = ssub.s32 %s8, %s15
    %p64 = scmp.eq.s32.totalorder %s63, 0
    %s66 = sadd.s32 %s65, 1
    %s67 = scalar_select %p64, %s65, %s66
    %p70 = pneg %p64
    %p71 = scmp.eq.s32.totalorder %s8, 1
    %p72 = por %p70, %p71
    %p73 = scmp.ne.s32.totalorder %s65, %s68
    %p74 = scmp.eq.s32.totalorder %s8, 0
    %p75 = por %p73, %p74
    %p76 = scmp.ne.s32.totalorder %s65, %s68
    %p77 = scmp.eq.s32.totalorder %s13, 1
    %p78 = por %p76, %p77
    %p79 = scmp.ne.s32.totalorder %s68, %s69
    %p80 = scmp.eq.s32.totalorder %s13, 0
    %p81 = por %p79, %p80
    %p82 = scmp.ne.s32.totalorder %s68, %s69
    %p83 = scmp.eq.s32.totalorder %s14, 1
    %p84 = por %p82, %p83
    %p86 = scmp.ne.s32.totalorder %s69, %s85
    %p87 = scmp.eq.s32.totalorder %s14, 0
    %p88 = por %p86, %p87
    %p89 = scmp.le.s32.totalorder 1, %s8
    %p90 = scmp.lt.s32.totalorder %s8, 3
    %p91 = pnand %p89, %p90
    %p92 = pneg %p91
    // Predicated region
    $region9: #{classifier_forward.1} parent=5 // pred_check
      _
    $region10: #{classifier_forward.1} parent=5 // pred_check_branch
      %94 = sbr.rel (%p91) target = $region12
    $region11: #{classifier_forward.1} parent=5 // pred_region
      %s95 = ssub.s32 %s8, 1
      // Predicated region
      $region13: #{classifier_forward.1} parent=11 // pred_check
        %p96 = pneg %p55
      $region14: #{classifier_forward.1} parent=11 // pred_check_branch
        %98 = sbr.rel (%p96) target = $region16
      $region15: #{classifier_forward.1} parent=11 // pred_region
        _
      $region16: #{classifier_forward.1} parent=11 // pred_fallthru
        _
    $region12: #{classifier_forward.1} parent=5 // pred_fallthru
      _
    %p99 = scmp.lt.s32.totalorder %s8, 2
    // Predicated region
    $region17: #{classifier_forward.1} parent=5 // pred_check
      %p100 = pneg %p99
    $region18: #{classifier_forward.1} parent=5 // pred_check_branch
      %102 = sbr.rel (%p100) target = $region20
    $region19: #{classifier_forward.1} parent=5 // pred_region
      // Predicated region
      $region21: #{classifier_forward.1} parent=19 // pred_check
        %p103 = pneg %p28
      $region22: #{classifier_forward.1} parent=19 // pred_check_branch
        %105 = sbr.rel (%p103) target = $region24
      $region23: #{classifier_forward.1} parent=19 // pred_region
        %s106 = smul.u32 32, %s8
        %p107 = scmp.lt.s32.totalorder %s106, 63
        %s108 = scalar_select %p107, %s106, 63
        %s109 = smul.addr %s108, 8
        %s110 = scalar_lea.vmem %s0, %s109
        %s111 = smul.u32 32, %s8
      $region24: #{classifier_forward.1} parent=19 // pred_fallthru
        _
    $region20: #{classifier_forward.1} parent=5 // pred_fallthru
      _
    %p112 = scmp.le.s32.totalorder 1, %s8
    %p113 = scmp.lt.s32.totalorder %s8, 3
    %p114 = pnand %p112, %p113
    %p115 = pneg %p114
    // Predicated region
    $region25: #{classifier_forward.1} parent=5 // pred_check
      _
    $region26: #{classifier_forward.1} parent=5 // pred_check_branch
      %117 = sbr.rel (%p114) target = $region28
    $region27: #{classifier_forward.1} parent=5 // pred_region
      %s118 = ssub.s32 %s8, 1
      %s119 = smul.u32 32, %s13
      %p120 = scmp.lt.s32.totalorder %s119, 63
      %s121 = scalar_select %p120, %s119, 63
      %s122 = smul.addr %s121, 8
      %s123 = scalar_lea.vmem %s0, %s122
      %p124 = pneg %p34
      %p125 = pneg %p31
      %p126 = pneg %p55
      %p127 = pneg %p52
      %p128 = pneg %p81
      %p129 = pneg %p78
      %s130 = smul.u32 32, %s13
      %p131 = scmp.lt.s32.totalorder %s130, 63
      %s132 = scalar_select %p131, %s130, 63
      %s133 = smul.addr %s132, 8
      %s134 = scalar_lea.vmem %s2, %s133
      %s135 = smul.u32 32, %s13
      %p136 = scmp.lt.s32.totalorder %s135, 63
      %s137 = scalar_select %p136, %s135, 63
      %s138 = smul.addr %s137, 8
      %s139 = scalar_lea.vmem %s0, %s138
      %s140 = smul.u32 32, %s13
      %s141 = smul.u32 32, %s13
      %p142 = scmp.lt.s32.totalorder %s141, 63
      %s143 = scalar_select %p142, %s141, 63
      %s144 = smul.addr %s143, 8
      %s145 = scalar_lea.vmem %s2, %s144
      %s146 = smul.u32 32, %s13
      %v148 = vld [vmem:[%s139] sm:$0xff]
      %v149 = vld [vmem:[%s139 + $0x8] sm:$0xff]
      %v150 = vld [vmem:[%s139 + $0x10] sm:$0xff]
      %v151 = vld [vmem:[%s139 + $0x18] sm:$0xff]
      %v152 = vld [vmem:[%s139 + $0x20] sm:$0xff]
      %v153 = vld [vmem:[%s139 + $0x28] sm:$0xff]
      %v154 = vld [vmem:[%s139 + $0x30] sm:$0xff]
      %v155 = vld [vmem:[%s139 + $0x38] sm:$0xff]
      %v156 = vld [vmem:[%s139 + $0x40] sm:$0xff]
      %v157 = vld [vmem:[%s139 + $0x48] sm:$0xff]
      %v158 = vld [vmem:[%s139 + $0x50] sm:$0xff]
      %v159 = vld [vmem:[%s139 + $0x58] sm:$0xff]
      %v160 = vld [vmem:[%s139 + $0x60] sm:$0xff]
      %v161 = vld [vmem:[%s139 + $0x68] sm:$0xff]
      %v162 = vld [vmem:[%s139 + $0x70] sm:$0xff]
      %v163 = vld [vmem:[%s139 + $0x78] sm:$0xff]
      %v164 = vld [vmem:[%s139 + $0x80] sm:$0xff]
      %v165 = vld [vmem:[%s139 + $0x88] sm:$0xff]
      %v166 = vld [vmem:[%s139 + $0x90] sm:$0xff]
      %v167 = vld [vmem:[%s139 + $0x98] sm:$0xff]
      %v168 = vld [vmem:[%s139 + $0xa0] sm:$0xff]
      %v169 = vld [vmem:[%s139 + $0xa8] sm:$0xff]
      %v170 = vld [vmem:[%s139 + $0xb0] sm:$0xff]
      %v171 = vld [vmem:[%s139 + $0xb8] sm:$0xff]
      %v172 = vld [vmem:[%s139 + $0xc0] sm:$0xff]
      %v173 = vld [vmem:[%s139 + $0xc8] sm:$0xff]
      %v174 = vld [vmem:[%s139 + $0xd0] sm:$0xff]
      %v175 = vld [vmem:[%s139 + $0xd8] sm:$0xff]
      %v176 = vld [vmem:[%s139 + $0xe0] sm:$0xff]
      %v177 = vld [vmem:[%s139 + $0xe8] sm:$0xff]
      %v178 = vld [vmem:[%s139 + $0xf0] sm:$0xff]
      %v179 = vld [vmem:[%s139 + $0xf8] sm:$0xff]
      %v180 = vpack.c.bf16 %v149, %v148
      %v181 = vpack.c.bf16 %v151, %v150
      %v182 = vpack.c.bf16 %v153, %v152
      %v183 = vpack.c.bf16 %v155, %v154
      %v184 = vpack.c.bf16 %v157, %v156
      %v185 = vpack.c.bf16 %v159, %v158
      %v186 = vpack.c.bf16 %v161, %v160
      %v187 = vpack.c.bf16 %v163, %v162
      %v188 = vpack.c.bf16 %v165, %v164
      %v189 = vpack.c.bf16 %v167, %v166
      %v190 = vpack.c.bf16 %v169, %v168
      %v191 = vpack.c.bf16 %v171, %v170
      %v192 = vpack.c.bf16 %v173, %v172
      %v193 = vpack.c.bf16 %v175, %v174
      %v194 = vpack.c.bf16 %v177, %v176
      %v195 = vpack.c.bf16 %v179, %v178
      %v196 = vld [vmem:[%s1] sm:$0xf]
      %v197 = vld [vmem:[%s1 + $0x4] sm:$0xf]
      %v200 = vunpack.c.l.b16 %v196
      %v201 = vunpack.c.l.b16 %v197
      %v202 = vpack.c.b16 %v201, %v200
      %vm204 = vcmask 130048
      %v206 = vsel %vm204, %v180, 0
      %v209 = vsel %vm204, %v181, 0
      %v212 = vsel %vm204, %v182, 0
      %v215 = vsel %vm204, %v183, 0
      %v218 = vsel %vm204, %v184, 0
      %v221 = vsel %vm204, %v185, 0
      %v224 = vsel %vm204, %v186, 0
      %v227 = vsel %vm204, %v187, 0
      %v230 = vsel %vm204, %v188, 0
      %v233 = vsel %vm204, %v189, 0
      %v236 = vsel %vm204, %v190, 0
      %v239 = vsel %vm204, %v191, 0
      %v242 = vsel %vm204, %v192, 0
      %v245 = vsel %vm204, %v193, 0
      %v248 = vsel %vm204, %v194, 0
      %v251 = vsel %vm204, %v195, 0
      %253 = vmatprep.subr.bf16.mxu0 0
      %254 = vmatpush1.bf16.msra.mxu0 %v202
      %255 = vmatprep.subr.bf16.mxu0 0
      %256 = vmatpush1.bf16.msra.mxu0 0
      %257 = vmatprep.subr.bf16.mxu0 0
      %258 = vmatpush1.bf16.msra.mxu0 0
      %259 = vmatprep.subr.bf16.mxu0 0
      %260 = vmatpush1.bf16.msra.mxu0 0
      %261 = vmatprep.subr.bf16.mxu0 0
      %262 = vmatpush1.bf16.msra.mxu0 0
      %263 = vmatprep.subr.bf16.mxu0 0
      %264 = vmatpush1.bf16.msra.mxu0 0
      %265 = vmatprep.subr.bf16.mxu0 0
      %266 = vmatpush1.bf16.msra.mxu0 0
      %267 = vmatprep.subr.bf16.mxu0 0
      %268 = vmatpush1.bf16.msra.mxu0 0
      %269 = vmatprep.subr.bf16.mxu0 0
      %270 = vmatpush1.bf16.msra.mxu0 0
      %271 = vmatprep.subr.bf16.mxu0 0
      %272 = vmatpush1.bf16.msra.mxu0 0
      %273 = vmatprep.subr.bf16.mxu0 0
      %274 = vmatpush1.bf16.msra.mxu0 0
      %275 = vmatprep.subr.bf16.mxu0 0
      %276 = vmatpush1.bf16.msra.mxu0 0
      %277 = vmatprep.subr.bf16.mxu0 0
      %278 = vmatpush1.bf16.msra.mxu0 0
      %279 = vmatprep.subr.bf16.mxu0 0
      %280 = vmatpush1.bf16.msra.mxu0 0
      %281 = vmatprep.subr.bf16.mxu0 0
      %282 = vmatpush1.bf16.msra.mxu0 0
      %283 = vmatprep.subr.bf16.mxu0 0
      %284 = vmatpush1.bf16.msra.mxu0 0
      %285 = vmatprep.mubr.bf16.mxu0 0
      %286 = vmatmul.mubr.bf16.gmra.mrb[0].mxu0 %v206
      %v287 = vpop.f32.mrb[0].mxu0
      %v288 = vadd.f32 0.0, %v287
      %v289 = vpop.f32.mrb[0].mxu0
      %v290 = vpop.f32.mrb[0].mxu0
      %v291 = vadd.f32 0.0, %v290
      %v292 = vpop.f32.mrb[0].mxu0
      %293 = vmatprep.mubr.bf16.mxu0 0
      %294 = vmatmul.mubr.bf16.gmra.mrb[0].mxu0 %v209
      %v295 = vpop.f32.mrb[0].mxu0
      %v296 = vadd.f32 0.0, %v295
      %v297 = vpop.f32.mrb[0].mxu0
      %v298 = vpop.f32.mrb[0].mxu0
      %v299 = vadd.f32 0.0, %v298
      %v300 = vpop.f32.mrb[0].mxu0
      %301 = vmatprep.mubr.bf16.mxu0 0
      %302 = vmatmul.mubr.bf16.gmra.mrb[0].mxu0 %v212
      %v303 = vpop.f32.mrb[0].mxu0
      %v304 = vadd.f32 0.0, %v303
      %v305 = vpop.f32.mrb[0].mxu0
      %v306 = vpop.f32.mrb[0].mxu0
      %v307 = vadd.f32 0.0, %v306
      %v308 = vpop.f32.mrb[0].mxu0
      %309 = vmatprep.mubr.bf16.mxu0 0
      %310 = vmatmul.mubr.bf16.gmra.mrb[0].mxu0 %v215
      %v311 = vpop.f32.mrb[0].mxu0
      %v312 = vadd.f32 0.0, %v311
      %v313 = vpop.f32.mrb[0].mxu0
      %v314 = vpop.f32.mrb[0].mxu0
      %v315 = vadd.f32 0.0, %v314
      %v316 = vpop.f32.mrb[0].mxu0
      %317 = vmatprep.mubr.bf16.mxu0 0
      %318 = vmatmul.mubr.bf16.gmra.mrb[0].mxu0 %v218
      %v319 = vpop.f32.mrb[0].mxu0
      %v320 = vadd.f32 0.0, %v319
      %v321 = vpop.f32.mrb[0].mxu0
      %v322 = vpop.f32.mrb[0].mxu0
      %v323 = vadd.f32 0.0, %v322
      %v324 = vpop.f32.mrb[0].mxu0
      %325 = vmatprep.mubr.bf16.mxu0 0
      %326 = vmatmul.mubr.bf16.gmra.mrb[0].mxu0 %v221
      %v327 = vpop.f32.mrb[0].mxu0
      %v328 = vadd.f32 0.0, %v327
      %v329 = vpop.f32.mrb[0].mxu0
      %v330 = vpop.f32.mrb[0].mxu0
      %v331 = vadd.f32 0.0, %v330
      %v332 = vpop.f32.mrb[0].mxu0
      %333 = vmatprep.mubr.bf16.mxu0 0
      %334 = vmatmul.mubr.bf16.gmra.mrb[0].mxu0 %v224
      %v335 = vpop.f32.mrb[0].mxu0
      %v336 = vadd.f32 0.0, %v335
      %v337 = vpop.f32.mrb[0].mxu0
      %v338 = vpop.f32.mrb[0].mxu0
      %v339 = vadd.f32 0.0, %v338
      %v340 = vpop.f32.mrb[0].mxu0
      %341 = vmatprep.mubr.bf16.mxu0 0
      %342 = vmatmul.mubr.bf16.gmra.mrb[0].mxu0 %v227
      %v343 = vpop.f32.mrb[0].mxu0
      %v344 = vadd.f32 0.0, %v343
      %v345 = vpop.f32.mrb[0].mxu0
      %v346 = vpop.f32.mrb[0].mxu0
      %v347 = vadd.f32 0.0, %v346
      %v348 = vpop.f32.mrb[0].mxu0
      %349 = vmatprep.mubr.bf16.mxu0 0
      %350 = vmatmul.mubr.bf16.gmra.mrb[0].mxu0 %v230
      %v351 = vpop.f32.mrb[0].mxu0
      %v352 = vadd.f32 0.0, %v351
      %v353 = vpop.f32.mrb[0].mxu0
      %v354 = vpop.f32.mrb[0].mxu0
      %v355 = vadd.f32 0.0, %v354
      %v356 = vpop.f32.mrb[0].mxu0
      %357 = vmatprep.mubr.bf16.mxu0 0
      %358 = vmatmul.mubr.bf16.gmra.mrb[0].mxu0 %v233
      %v359 = vpop.f32.mrb[0].mxu0
      %v360 = vadd.f32 0.0, %v359
      %v361 = vpop.f32.mrb[0].mxu0
      %v362 = vpop.f32.mrb[0].mxu0
      %v363 = vadd.f32 0.0, %v362
      %v364 = vpop.f32.mrb[0].mxu0
      %365 = vmatprep.mubr.bf16.mxu0 0
      %366 = vmatmul.mubr.bf16.gmra.mrb[0].mxu0 %v236
      %v367 = vpop.f32.mrb[0].mxu0
      %v368 = vadd.f32 0.0, %v367
      %v369 = vpop.f32.mrb[0].mxu0
      %v370 = vpop.f32.mrb[0].mxu0
      %v371 = vadd.f32 0.0, %v370
      %v372 = vpop.f32.mrb[0].mxu0
      %373 = vmatprep.mubr.bf16.mxu0 0
      %374 = vmatmul.mubr.bf16.gmra.mrb[0].mxu0 %v239
      %v375 = vpop.f32.mrb[0].mxu0
      %v376 = vadd.f32 0.0, %v375
      %v377 = vpop.f32.mrb[0].mxu0
      %v378 = vpop.f32.mrb[0].mxu0
      %v379 = vadd.f32 0.0, %v378
      %v380 = vpop.f32.mrb[0].mxu0
      %381 = vmatprep.mubr.bf16.mxu0 0
      %382 = vmatmul.mubr.bf16.gmra.mrb[0].mxu0 %v242
      %v383 = vpop.f32.mrb[0].mxu0
      %v384 = vadd.f32 0.0, %v383
      %v385 = vpop.f32.mrb[0].mxu0
      %v386 = vpop.f32.mrb[0].mxu0
      %v387 = vadd.f32 0.0, %v386
      %v388 = vpop.f32.mrb[0].mxu0
      %389 = vmatprep.mubr.bf16.mxu0 0
      %390 = vmatmul.mubr.bf16.gmra.mrb[0].mxu0 %v245
      %v391 = vpop.f32.mrb[0].mxu0
      %v392 = vadd.f32 0.0, %v391
      %v393 = vpop.f32.mrb[0].mxu0
      %v394 = vpop.f32.mrb[0].mxu0
      %v395 = vadd.f32 0.0, %v394
      %v396 = vpop.f32.mrb[0].mxu0
      %397 = vmatprep.mubr.bf16.mxu0 0
      %398 = vmatmul.mubr.bf16.gmra.mrb[0].mxu0 %v248
      %v399 = vpop.f32.mrb[0].mxu0
      %v400 = vadd.f32 0.0, %v399
      %v401 = vpop.f32.mrb[0].mxu0
      %v402 = vpop.f32.mrb[0].mxu0
      %v403 = vadd.f32 0.0, %v402
      %v404 = vpop.f32.mrb[0].mxu0
      %405 = vmatprep.mubr.bf16.mxu0 0
      %406 = vmatmul.mubr.bf16.gmra.mrb[0].mxu0 %v251
      %v407 = vpop.f32.mrb[0].mxu0
      %v408 = vadd.f32 0.0, %v407
      %v409 = vpop.f32.mrb[0].mxu0
      %v410 = vpop.f32.mrb[0].mxu0
      %v411 = vadd.f32 0.0, %v410
      %v412 = vpop.f32.mrb[0].mxu0
      %413 = vdwg.mxu0
      %v414 = vmax.f32 %v288, 0.0
      %v415 = vmax.f32 %v291, 0.0
      %v416 = vmax.f32 %v296, 0.0
      %v417 = vmax.f32 %v299, 0.0
      %v418 = vmax.f32 %v304, 0.0
      %v419 = vmax.f32 %v307, 0.0
      %v420 = vmax.f32 %v312, 0.0
      %v421 = vmax.f32 %v315, 0.0
      %v422 = vmax.f32 %v320, 0.0
      %v423 = vmax.f32 %v323, 0.0
      %v424 = vmax.f32 %v328, 0.0
      %v425 = vmax.f32 %v331, 0.0
      %v426 = vmax.f32 %v336, 0.0
      %v427 = vmax.f32 %v339, 0.0
      %v428 = vmax.f32 %v344, 0.0
      %v429 = vmax.f32 %v347, 0.0
      %v430 = vmax.f32 %v352, 0.0
      %v431 = vmax.f32 %v355, 0.0
      %v432 = vmax.f32 %v360, 0.0
      %v433 = vmax.f32 %v363, 0.0
      %v434 = vmax.f32 %v368, 0.0
      %v435 = vmax.f32 %v371, 0.0
      %v436 = vmax.f32 %v376, 0.0
      %v437 = vmax.f32 %v379, 0.0
      %v438 = vmax.f32 %v384, 0.0
      %v439 = vmax.f32 %v387, 0.0
      %v440 = vmax.f32 %v392, 0.0
      %v441 = vmax.f32 %v395, 0.0
      %v442 = vmax.f32 %v400, 0.0
      %v443 = vmax.f32 %v403, 0.0
      %v444 = vmax.f32 %v408, 0.0
      %v445 = vmax.f32 %v411, 0.0
      %v446 = vpack.c.bf16 %v415, %v414
      %v447 = vpack.c.bf16 %v417, %v416
      %v448 = vpack.c.bf16 %v419, %v418
      %v449 = vpack.c.bf16 %v421, %v420
      %v450 = vpack.c.bf16 %v423, %v422
      %v451 = vpack.c.bf16 %v425, %v424
      %v452 = vpack.c.bf16 %v427, %v426
      %v453 = vpack.c.bf16 %v429, %v428
      %v454 = vpack.c.bf16 %v431, %v430
      %v455 = vpack.c.bf16 %v433, %v432
      %v456 = vpack.c.bf16 %v435, %v434
      %v457 = vpack.c.bf16 %v437, %v436
      %v458 = vpack.c.bf16 %v439, %v438
      %v459 = vpack.c.bf16 %v441, %v440
      %v460 = vpack.c.bf16 %v443, %v442
      %v461 = vpack.c.bf16 %v445, %v444
      %s462 = scalar_lea.vmem %s1, 8
      %v463 = vld [vmem:[%s462] sm:$0xf]
      %v464 = vld [vmem:[%s462 + $0x4] sm:$0xf]
      %v467 = vunpack.c.l.b16 %v463
      %v468 = vunpack.c.l.b16 %v464
      %v469 = vpack.c.b16 %v468, %v467
      %v472 = vsel %vm204, %v446, 0
      %v475 = vsel %vm204, %v447, 0
      %v478 = vsel %vm204, %v448, 0
      %v481 = vsel %vm204, %v449, 0
      %v484 = vsel %vm204, %v450, 0
      %v487 = vsel %vm204, %v451, 0
      %v490 = vsel %vm204, %v452, 0
      %v493 = vsel %vm204, %v453, 0
      %v496 = vsel %vm204, %v454, 0
      %v499 = vsel %vm204, %v455, 0
      %v502 = vsel %vm204, %v456, 0
      %v505 = vsel %vm204, %v457, 0
      %v508 = vsel %vm204, %v458, 0
      %v511 = vsel %vm204, %v459, 0
      %v514 = vsel %vm204, %v460, 0
      %v517 = vsel %vm204, %v461, 0
      %519 = vmatprep.subr.bf16.mxu0 0
      %520 = vmatpush1.bf16.msra.mxu0 %v469
      %521 = vmatprep.subr.bf16.mxu0 0
      %522 = vmatpush1.bf16.msra.mxu0 0
      %523 = vmatprep.subr.bf16.mxu0 0
      %524 = vmatpush1.bf16.msra.mxu0 0
      %525 = vmatprep.subr.bf16.mxu0 0
      %526 = vmatpush1.bf16.msra.mxu0 0
      %527 = vmatprep.subr.bf16.mxu0 0
      %528 = vmatpush1.bf16.msra.mxu0 0
      %529 = vmatprep.subr.bf16.mxu0 0
      %530 = vmatpush1.bf16.msra.mxu0 0
      %531 = vmatprep.subr.bf16.mxu0 0
      %532 = vmatpush1.bf16.msra.mxu0 0
      %533 = vmatprep.subr.bf16.mxu0 0
      %534 = vmatpush1.bf16.msra.mxu0 0
      %535 = vmatprep.subr.bf16.mxu0 0
      %536 = vmatpush1.bf16.msra.mxu0 0
      %537 = vmatprep.subr.bf16.mxu0 0
      %538 = vmatpush1.bf16.msra.mxu0 0
      %539 = vmatprep.subr.bf16.mxu0 0
      %540 = vmatpush1.bf16.msra.mxu0 0
      %541 = vmatprep.subr.bf16.mxu0 0
      %542 = vmatpush1.bf16.msra.mxu0 0
      %543 = vmatprep.subr.bf16.mxu0 0
      %544 = vmatpush1.bf16.msra.mxu0 0
      %545 = vmatprep.subr.bf16.mxu0 0
      %546 = vmatpush1.bf16.msra.mxu0 0
      %547 = vmatprep.subr.bf16.mxu0 0
      %548 = vmatpush1.bf16.msra.mxu0 0
      %549 = vmatprep.subr.bf16.mxu0 0
      %550 = vmatpush1.bf16.msra.mxu0 0
      %551 = vmatprep.mubr.bf16.mxu0 0
      %552 = vmatmul.mubr.bf16.gmra.mrb[0].mxu0 %v472
      %v553 = vpop.f32.mrb[0].mxu0
      %v554 = vadd.f32 0.0, %v553
      %v555 = vpop.f32.mrb[0].mxu0
      %v556 = vpop.f32.mrb[0].mxu0
      %v557 = vadd.f32 0.0, %v556
      %v558 = vpop.f32.mrb[0].mxu0
      %559 = vmatprep.mubr.bf16.mxu0 0
      %560 = vmatmul.mubr.bf16.gmra.mrb[0].mxu0 %v475
      %v561 = vpop.f32.mrb[0].mxu0
      %v562 = vadd.f32 0.0, %v561
      %v563 = vpop.f32.mrb[0].mxu0
      %v564 = vpop.f32.mrb[0].mxu0
      %v565 = vadd.f32 0.0, %v564
      %v566 = vpop.f32.mrb[0].mxu0
      %567 = vmatprep.mubr.bf16.mxu0 0
      %568 = vmatmul.mubr.bf16.gmra.mrb[0].mxu0 %v478
      %v569 = vpop.f32.mrb[0].mxu0
      %v570 = vadd.f32 0.0, %v569
      %v571 = vpop.f32.mrb[0].mxu0
      %v572 = vpop.f32.mrb[0].mxu0
      %v573 = vadd.f32 0.0, %v572
      %v574 = vpop.f32.mrb[0].mxu0
      %575 = vmatprep.mubr.bf16.mxu0 0
      %576 = vmatmul.mubr.bf16.gmra.mrb[0].mxu0 %v481
      %v577 = vpop.f32.mrb[0].mxu0
      %v578 = vadd.f32 0.0, %v577
      %v579 = vpop.f32.mrb[0].mxu0
      %v580 = vpop.f32.mrb[0].mxu0
      %v581 = vadd.f32 0.0, %v580
      %v582 = vpop.f32.mrb[0].mxu0
      %583 = vmatprep.mubr.bf16.mxu0 0
      %584 = vmatmul.mubr.bf16.gmra.mrb[0].mxu0 %v484
      %v585 = vpop.f32.mrb[0].mxu0
      %v586 = vadd.f32 0.0, %v585
      %v587 = vpop.f32.mrb[0].mxu0
      %v588 = vpop.f32.mrb[0].mxu0
      %v589 = vadd.f32 0.0, %v588
      %v590 = vpop.f32.mrb[0].mxu0
      %591 = vmatprep.mubr.bf16.mxu0 0
      %592 = vmatmul.mubr.bf16.gmra.mrb[0].mxu0 %v487
      %v593 = vpop.f32.mrb[0].mxu0
      %v594 = vadd.f32 0.0, %v593
      %v595 = vpop.f32.mrb[0].mxu0
      %v596 = vpop.f32.mrb[0].mxu0
      %v597 = vadd.f32 0.0, %v596
      %v598 = vpop.f32.mrb[0].mxu0
      %599 = vmatprep.mubr.bf16.mxu0 0
      %600 = vmatmul.mubr.bf16.gmra.mrb[0].mxu0 %v490
      %v601 = vpop.f32.mrb[0].mxu0
      %v602 = vadd.f32 0.0, %v601
      %v603 = vpop.f32.mrb[0].mxu0
      %v604 = vpop.f32.mrb[0].mxu0
      %v605 = vadd.f32 0.0, %v604
      %v606 = vpop.f32.mrb[0].mxu0
      %607 = vmatprep.mubr.bf16.mxu0 0
      %608 = vmatmul.mubr.bf16.gmra.mrb[0].mxu0 %v493
      %v609 = vpop.f32.mrb[0].mxu0
      %v610 = vadd.f32 0.0, %v609
      %v611 = vpop.f32.mrb[0].mxu0
      %v612 = vpop.f32.mrb[0].mxu0
      %v613 = vadd.f32 0.0, %v612
      %v614 = vpop.f32.mrb[0].mxu0
      %615 = vmatprep.mubr.bf16.mxu0 0
      %616 = vmatmul.mubr.bf16.gmra.mrb[0].mxu0 %v496
      %v617 = vpop.f32.mrb[0].mxu0
      %v618 = vadd.f32 0.0, %v617
      %v619 = vpop.f32.mrb[0].mxu0
      %v620 = vpop.f32.mrb[0].mxu0
      %v621 = vadd.f32 0.0, %v620
      %v622 = vpop.f32.mrb[0].mxu0
      %623 = vmatprep.mubr.bf16.mxu0 0
      %624 = vmatmul.mubr.bf16.gmra.mrb[0].mxu0 %v499
      %v625 = vpop.f32.mrb[0].mxu0
      %v626 = vadd.f32 0.0, %v625
      %v627 = vpop.f32.mrb[0].mxu0
      %v628 = vpop.f32.mrb[0].mxu0
      %v629 = vadd.f32 0.0, %v628
      %v630 = vpop.f32.mrb[0].mxu0
      %631 = vmatprep.mubr.bf16.mxu0 0
      %632 = vmatmul.mubr.bf16.gmra.mrb[0].mxu0 %v502
      %v633 = vpop.f32.mrb[0].mxu0
      %v634 = vadd.f32 0.0, %v633
      %v635 = vpop.f32.mrb[0].mxu0
      %v636 = vpop.f32.mrb[0].mxu0
      %v637 = vadd.f32 0.0, %v636
      %v638 = vpop.f32.mrb[0].mxu0
      %639 = vmatprep.mubr.bf16.mxu0 0
      %640 = vmatmul.mubr.bf16.gmra.mrb[0].mxu0 %v505
      %v641 = vpop.f32.mrb[0].mxu0
      %v642 = vadd.f32 0.0, %v641
      %v643 = vpop.f32.mrb[0].mxu0
      %v644 = vpop.f32.mrb[0].mxu0
      %v645 = vadd.f32 0.0, %v644
      %v646 = vpop.f32.mrb[0].mxu0
      %647 = vmatprep.mubr.bf16.mxu0 0
      %648 = vmatmul.mubr.bf16.gmra.mrb[0].mxu0 %v508
      %v649 = vpop.f32.mrb[0].mxu0
      %v650 = vadd.f32 0.0, %v649
      %v651 = vpop.f32.mrb[0].mxu0
      %v652 = vpop.f32.mrb[0].mxu0
      %v653 = vadd.f32 0.0, %v652
      %v654 = vpop.f32.mrb[0].mxu0
      %655 = vmatprep.mubr.bf16.mxu0 0
      %656 = vmatmul.mubr.bf16.gmra.mrb[0].mxu0 %v511
      %v657 = vpop.f32.mrb[0].mxu0
      %v658 = vadd.f32 0.0, %v657
      %v659 = vpop.f32.mrb[0].mxu0
      %v660 = vpop.f32.mrb[0].mxu0
      %v661 = vadd.f32 0.0, %v660
      %v662 = vpop.f32.mrb[0].mxu0
      %663 = vmatprep.mubr.bf16.mxu0 0
      %664 = vmatmul.mubr.bf16.gmra.mrb[0].mxu0 %v514
      %v665 = vpop.f32.mrb[0].mxu0
      %v666 = vadd.f32 0.0, %v665
      %v667 = vpop.f32.mrb[0].mxu0
      %v668 = vpop.f32.mrb[0].mxu0
      %v669 = vadd.f32 0.0, %v668
      %v670 = vpop.f32.mrb[0].mxu0
      %671 = vmatprep.mubr.bf16.mxu0 0
      %672 = vmatmul.mubr.bf16.gmra.mrb[0].mxu0 %v517
      %v673 = vpop.f32.mrb[0].mxu0
      %v674 = vadd.f32 0.0, %v673
      %v675 = vpop.f32.mrb[0].mxu0
      %v676 = vpop.f32.mrb[0].mxu0
      %v677 = vadd.f32 0.0, %v676
      %v678 = vpop.f32.mrb[0].mxu0
      %679 = vdwg.mxu0
      %v680 = vmax.f32 %v554, 0.0
      %v681 = vmax.f32 %v557, 0.0
      %v682 = vmax.f32 %v562, 0.0
      %v683 = vmax.f32 %v565, 0.0
      %v684 = vmax.f32 %v570, 0.0
      %v685 = vmax.f32 %v573, 0.0
      %v686 = vmax.f32 %v578, 0.0
      %v687 = vmax.f32 %v581, 0.0
      %v688 = vmax.f32 %v586, 0.0
      %v689 = vmax.f32 %v589, 0.0
      %v690 = vmax.f32 %v594, 0.0
      %v691 = vmax.f32 %v597, 0.0
      %v692 = vmax.f32 %v602, 0.0
      %v693 = vmax.f32 %v605, 0.0
      %v694 = vmax.f32 %v610, 0.0
      %v695 = vmax.f32 %v613, 0.0
      %v696 = vmax.f32 %v618, 0.0
      %v697 = vmax.f32 %v621, 0.0
      %v698 = vmax.f32 %v626, 0.0
      %v699 = vmax.f32 %v629, 0.0
      %v700 = vmax.f32 %v634, 0.0
      %v701 = vmax.f32 %v637, 0.0
      %v702 = vmax.f32 %v642, 0.0
      %v703 = vmax.f32 %v645, 0.0
      %v704 = vmax.f32 %v650, 0.0
      %v705 = vmax.f32 %v653, 0.0
      %v706 = vmax.f32 %v658, 0.0
      %v707 = vmax.f32 %v661, 0.0
      %v708 = vmax.f32 %v666, 0.0
      %v709 = vmax.f32 %v669, 0.0
      %v710 = vmax.f32 %v674, 0.0
      %v711 = vmax.f32 %v677, 0.0
      %v712 = vpack.c.bf16 %v681, %v680
      %v713 = vpack.c.bf16 %v683, %v682
      %v714 = vpack.c.bf16 %v685, %v684
      %v715 = vpack.c.bf16 %v687, %v686
      %v716 = vpack.c.bf16 %v689, %v688
      %v717 = vpack.c.bf16 %v691, %v690
      %v718 = vpack.c.bf16 %v693, %v692
      %v719 = vpack.c.bf16 %v695, %v694
      %v720 = vpack.c.bf16 %v697, %v696
      %v721 = vpack.c.bf16 %v699, %v698
      %v722 = vpack.c.bf16 %v701, %v700
      %v723 = vpack.c.bf16 %v703, %v702
      %v724 = vpack.c.bf16 %v705, %v704
      %v725 = vpack.c.bf16 %v707, %v706
      %v726 = vpack.c.bf16 %v709, %v708
      %v727 = vpack.c.bf16 %v711, %v710
      %s728 = scalar_lea.vmem %s1, 16
      %v729 = vld [vmem:[%s728] sm:$0xf]
      %v730 = vld [vmem:[%s728 + $0x4] sm:$0xf]
      %v733 = vunpack.c.l.b16 %v729
      %v734 = vunpack.c.l.b16 %v730
      %v735 = vpack.c.b16 %v734, %v733
      %v738 = vsel %vm204, %v712, 0
      %v741 = vsel %vm204, %v713, 0
      %v744 = vsel %vm204, %v714, 0
      %v747 = vsel %vm204, %v715, 0
      %v750 = vsel %vm204, %v716, 0
      %v753 = vsel %vm204, %v717, 0
      %v756 = vsel %vm204, %v718, 0
      %v759 = vsel %vm204, %v719, 0
      %v762 = vsel %vm204, %v720, 0
      %v765 = vsel %vm204, %v721, 0
      %v768 = vsel %vm204, %v722, 0
      %v771 = vsel %vm204, %v723, 0
      %v774 = vsel %vm204, %v724, 0
      %v777 = vsel %vm204, %v725, 0
      %v780 = vsel %vm204, %v726, 0
      %v783 = vsel %vm204, %v727, 0
      %785 = vmatprep.subr.bf16.mxu0 0
      %786 = vmatpush1.bf16.msra.mxu0 %v735
      %787 = vmatprep.subr.bf16.mxu0 0
      %788 = vmatpush1.bf16.msra.mxu0 0
      %789 = vmatprep.subr.bf16.mxu0 0
      %790 = vmatpush1.bf16.msra.mxu0 0
      %791 = vmatprep.subr.bf16.mxu0 0
      %792 = vmatpush1.bf16.msra.mxu0 0
      %793 = vmatprep.subr.bf16.mxu0 0
      %794 = vmatpush1.bf16.msra.mxu0 0
      %795 = vmatprep.subr.bf16.mxu0 0
      %796 = vmatpush1.bf16.msra.mxu0 0
      %797 = vmatprep.subr.bf16.mxu0 0
      %798 = vmatpush1.bf16.msra.mxu0 0
      %799 = vmatprep.subr.bf16.mxu0 0
      %800 = vmatpush1.bf16.msra.mxu0 0
      %801 = vmatprep.subr.bf16.mxu0 0
      %802 = vmatpush1.bf16.msra.mxu0 0
      %803 = vmatprep.subr.bf16.mxu0 0
      %804 = vmatpush1.bf16.msra.mxu0 0
      %805 = vmatprep.subr.bf16.mxu0 0
      %806 = vmatpush1.bf16.msra.mxu0 0
      %807 = vmatprep.subr.bf16.mxu0 0
      %808 = vmatpush1.bf16.msra.mxu0 0
      %809 = vmatprep.subr.bf16.mxu0 0
      %810 = vmatpush1.bf16.msra.mxu0 0
      %811 = vmatprep.subr.bf16.mxu0 0
      %812 = vmatpush1.bf16.msra.mxu0 0
      %813 = vmatprep.subr.bf16.mxu0 0
      %814 = vmatpush1.bf16.msra.mxu0 0
      %815 = vmatprep.subr.bf16.mxu0 0
      %816 = vmatpush1.bf16.msra.mxu0 0
      %817 = vmatprep.mubr.bf16.mxu0 0
      %818 = vmatmul.mubr.bf16.gmra.mrb[0].mxu0 %v738
      %v819 = vpop.f32.mrb[0].mxu0
      %v820 = vadd.f32 0.0, %v819
      %v821 = vpop.f32.mrb[0].mxu0
      %v822 = vpop.f32.mrb[0].mxu0
      %v823 = vadd.f32 0.0, %v822
      %v824 = vpop.f32.mrb[0].mxu0
      %825 = vmatprep.mubr.bf16.mxu0 0
      %826 = vmatmul.mubr.bf16.gmra.mrb[0].mxu0 %v741
      %v827 = vpop.f32.mrb[0].mxu0
      %v828 = vadd.f32 0.0, %v827
      %v829 = vpop.f32.mrb[0].mxu0
      %v830 = vpop.f32.mrb[0].mxu0
      %v831 = vadd.f32 0.0, %v830
      %v832 = vpop.f32.mrb[0].mxu0
      %833 = vmatprep.mubr.bf16.mxu0 0
      %834 = vmatmul.mubr.bf16.gmra.mrb[0].mxu0 %v744
      %v835 = vpop.f32.mrb[0].mxu0
      %v836 = vadd.f32 0.0, %v835
      %v837 = vpop.f32.mrb[0].mxu0
      %v838 = vpop.f32.mrb[0].mxu0
      %v839 = vadd.f32 0.0, %v838
      %v840 = vpop.f32.mrb[0].mxu0
      %841 = vmatprep.mubr.bf16.mxu0 0
      %842 = vmatmul.mubr.bf16.gmra.mrb[0].mxu0 %v747
      %v843 = vpop.f32.mrb[0].mxu0
      %v844 = vadd.f32 0.0, %v843
      %v845 = vpop.f32.mrb[0].mxu0
      %v846 = vpop.f32.mrb[0].mxu0
      %v847 = vadd.f32 0.0, %v846
      %v848 = vpop.f32.mrb[0].mxu0
      %849 = vmatprep.mubr.bf16.mxu0 0
      %850 = vmatmul.mubr.bf16.gmra.mrb[0].mxu0 %v750
      %v851 = vpop.f32.mrb[0].mxu0
      %v852 = vadd.f32 0.0, %v851
      %v853 = vpop.f32.mrb[0].mxu0
      %v854 = vpop.f32.mrb[0].mxu0
      %v855 = vadd.f32 0.0, %v854
      %v856 = vpop.f32.mrb[0].mxu0
      %857 = vmatprep.mubr.bf16.mxu0 0
      %858 = vmatmul.mubr.bf16.gmra.mrb[0].mxu0 %v753
      %v859 = vpop.f32.mrb[0].mxu0
      %v860 = vadd.f32 0.0, %v859
      %v861 = vpop.f32.mrb[0].mxu0
      %v862 = vpop.f32.mrb[0].mxu0
      %v863 = vadd.f32 0.0, %v862
      %v864 = vpop.f32.mrb[0].mxu0
      %865 = vmatprep.mubr.bf16.mxu0 0
      %866 = vmatmul.mubr.bf16.gmra.mrb[0].mxu0 %v756
      %v867 = vpop.f32.mrb[0].mxu0
      %v868 = vadd.f32 0.0, %v867
      %v869 = vpop.f32.mrb[0].mxu0
      %v870 = vpop.f32.mrb[0].mxu0
      %v871 = vadd.f32 0.0, %v870
      %v872 = vpop.f32.mrb[0].mxu0
      %873 = vmatprep.mubr.bf16.mxu0 0
      %874 = vmatmul.mubr.bf16.gmra.mrb[0].mxu0 %v759
      %v875 = vpop.f32.mrb[0].mxu0
      %v876 = vadd.f32 0.0, %v875
      %v877 = vpop.f32.mrb[0].mxu0
      %v878 = vpop.f32.mrb[0].mxu0
      %v879 = vadd.f32 0.0, %v878
      %v880 = vpop.f32.mrb[0].mxu0
      %881 = vmatprep.mubr.bf16.mxu0 0
      %882 = vmatmul.mubr.bf16.gmra.mrb[0].mxu0 %v762
      %v883 = vpop.f32.mrb[0].mxu0
      %v884 = vadd.f32 0.0, %v883
      %v885 = vpop.f32.mrb[0].mxu0
      %v886 = vpop.f32.mrb[0].mxu0
      %v887 = vadd.f32 0.0, %v886
      %v888 = vpop.f32.mrb[0].mxu0
      %889 = vmatprep.mubr.bf16.mxu0 0
      %890 = vmatmul.mubr.bf16.gmra.mrb[0].mxu0 %v765
      %v891 = vpop.f32.mrb[0].mxu0
      %v892 = vadd.f32 0.0, %v891
      %v893 = vpop.f32.mrb[0].mxu0
      %v894 = vpop.f32.mrb[0].mxu0
      %v895 = vadd.f32 0.0, %v894
      %v896 = vpop.f32.mrb[0].mxu0
      %897 = vmatprep.mubr.bf16.mxu0 0
      %898 = vmatmul.mubr.bf16.gmra.mrb[0].mxu0 %v768
      %v899 = vpop.f32.mrb[0].mxu0
      %v900 = vadd.f32 0.0, %v899
      %v901 = vpop.f32.mrb[0].mxu0
      %v902 = vpop.f32.mrb[0].mxu0
      %v903 = vadd.f32 0.0, %v902
      %v904 = vpop.f32.mrb[0].mxu0
      %905 = vmatprep.mubr.bf16.mxu0 0
      %906 = vmatmul.mubr.bf16.gmra.mrb[0].mxu0 %v771
      %v907 = vpop.f32.mrb[0].mxu0
      %v908 = vadd.f32 0.0, %v907
      %v909 = vpop.f32.mrb[0].mxu0
      %v910 = vpop.f32.mrb[0].mxu0
      %v911 = vadd.f32 0.0, %v910
      %v912 = vpop.f32.mrb[0].mxu0
      %913 = vmatprep.mubr.bf16.mxu0 0
      %914 = vmatmul.mubr.bf16.gmra.mrb[0].mxu0 %v774
      %v915 = vpop.f32.mrb[0].mxu0
      %v916 = vadd.f32 0.0, %v915
      %v917 = vpop.f32.mrb[0].mxu0
      %v918 = vpop.f32.mrb[0].mxu0
      %v919 = vadd.f32 0.0, %v918
      %v920 = vpop.f32.mrb[0].mxu0
      %921 = vmatprep.mubr.bf16.mxu0 0
      %922 = vmatmul.mubr.bf16.gmra.mrb[0].mxu0 %v777
      %v923 = vpop.f32.mrb[0].mxu0
      %v924 = vadd.f32 0.0, %v923
      %v925 = vpop.f32.mrb[0].mxu0
      %v926 = vpop.f32.mrb[0].mxu0
      %v927 = vadd.f32 0.0, %v926
      %v928 = vpop.f32.mrb[0].mxu0
      %929 = vmatprep.mubr.bf16.mxu0 0
      %930 = vmatmul.mubr.bf16.gmra.mrb[0].mxu0 %v780
      %v931 = vpop.f32.mrb[0].mxu0
      %v932 = vadd.f32 0.0, %v931
      %v933 = vpop.f32.mrb[0].mxu0
      %v934 = vpop.f32.mrb[0].mxu0
      %v935 = vadd.f32 0.0, %v934
      %v936 = vpop.f32.mrb[0].mxu0
      %937 = vmatprep.mubr.bf16.mxu0 0
      %938 = vmatmul.mubr.bf16.gmra.mrb[0].mxu0 %v783
      %v939 = vpop.f32.mrb[0].mxu0
      %v940 = vadd.f32 0.0, %v939
      %v941 = vpop.f32.mrb[0].mxu0
      %v942 = vpop.f32.mrb[0].mxu0
      %v943 = vadd.f32 0.0, %v942
      %v944 = vpop.f32.mrb[0].mxu0
      %945 = vdwg.mxu0
      %v946 = vmax.f32 %v820, 0.0
      %v947 = vmax.f32 %v823, 0.0
      %v948 = vmax.f32 %v828, 0.0
      %v949 = vmax.f32 %v831, 0.0
      %v950 = vmax.f32 %v836, 0.0
      %v951 = vmax.f32 %v839, 0.0
      %v952 = vmax.f32 %v844, 0.0
      %v953 = vmax.f32 %v847, 0.0
      %v954 = vmax.f32 %v852, 0.0
      %v955 = vmax.f32 %v855, 0.0
      %v956 = vmax.f32 %v860, 0.0
      %v957 = vmax.f32 %v863, 0.0
      %v958 = vmax.f32 %v868, 0.0
      %v959 = vmax.f32 %v871, 0.0
      %v960 = vmax.f32 %v876, 0.0
      %v961 = vmax.f32 %v879, 0.0
      %v962 = vmax.f32 %v884, 0.0
      %v963 = vmax.f32 %v887, 0.0
      %v964 = vmax.f32 %v892, 0.0
      %v965 = vmax.f32 %v895, 0.0
      %v966 = vmax.f32 %v900, 0.0
      %v967 = vmax.f32 %v903, 0.0
      %v968 = vmax.f32 %v908, 0.0
      %v969 = vmax.f32 %v911, 0.0
      %v970 = vmax.f32 %v916, 0.0
      %v971 = vmax.f32 %v919, 0.0
      %v972 = vmax.f32 %v924, 0.0
      %v973 = vmax.f32 %v927, 0.0
      %v974 = vmax.f32 %v932, 0.0
      %v975 = vmax.f32 %v935, 0.0
      %v976 = vmax.f32 %v940, 0.0
      %v977 = vmax.f32 %v943, 0.0
      %v978 = vpack.c.bf16 %v947, %v946
      %v979 = vpack.c.bf16 %v949, %v948
      %v980 = vpack.c.bf16 %v951, %v950
      %v981 = vpack.c.bf16 %v953, %v952
      %v982 = vpack.c.bf16 %v955, %v954
      %v983 = vpack.c.bf16 %v957, %v956
      %v984 = vpack.c.bf16 %v959, %v958
      %v985 = vpack.c.bf16 %v961, %v960
      %v986 = vpack.c.bf16 %v963, %v962
      %v987 = vpack.c.bf16 %v965, %v964
      %v988 = vpack.c.bf16 %v967, %v966
      %v989 = vpack.c.bf16 %v969, %v968
      %v990 = vpack.c.bf16 %v971, %v970
      %v991 = vpack.c.bf16 %v973, %v972
      %v992 = vpack.c.bf16 %v975, %v974
      %v993 = vpack.c.bf16 %v977, %v976
      %s994 = scalar_lea.vmem %s1, 24
      %v995 = vld [vmem:[%s994] sm:$0xf]
      %v996 = vld [vmem:[%s994 + $0x4] sm:$0xf]
      %v999 = vunpack.c.l.b16 %v995
      %v1000 = vunpack.c.l.b16 %v996
      %v1001 = vpack.c.b16 %v1000, %v999
      %v1004 = vsel %vm204, %v978, 0
      %v1007 = vsel %vm204, %v979, 0
      %v1010 = vsel %vm204, %v980, 0
      %v1013 = vsel %vm204, %v981, 0
      %v1016 = vsel %vm204, %v982, 0
      %v1019 = vsel %vm204, %v983, 0
      %v1022 = vsel %vm204, %v984, 0
      %v1025 = vsel %vm204, %v985, 0
      %v1028 = vsel %vm204, %v986, 0
      %v1031 = vsel %vm204, %v987, 0
      %v1034 = vsel %vm204, %v988, 0
      %v1037 = vsel %vm204, %v989, 0
      %v1040 = vsel %vm204, %v990, 0
      %v1043 = vsel %vm204, %v991, 0
      %v1046 = vsel %vm204, %v992, 0
      %v1049 = vsel %vm204, %v993, 0
      %1051 = vmatprep.subr.bf16.mxu0 0
      %1052 = vmatpush1.bf16.msra.mxu0 %v1001
      %1053 = vmatprep.subr.bf16.mxu0 0
      %1054 = vmatpush1.bf16.msra.mxu0 0
      %1055 = vmatprep.subr.bf16.mxu0 0
      %1056 = vmatpush1.bf16.msra.mxu0 0
      %1057 = vmatprep.subr.bf16.mxu0 0
      %1058 = vmatpush1.bf16.msra.mxu0 0
      %1059 = vmatprep.subr.bf16.mxu0 0
      %1060 = vmatpush1.bf16.msra.mxu0 0
      %1061 = vmatprep.subr.bf16.mxu0 0
      %1062 = vmatpush1.bf16.msra.mxu0 0
      %1063 = vmatprep.subr.bf16.mxu0 0
      %1064 = vmatpush1.bf16.msra.mxu0 0
      %1065 = vmatprep.subr.bf16.mxu0 0
      %1066 = vmatpush1.bf16.msra.mxu0 0
      %1067 = vmatprep.subr.bf16.mxu0 0
      %1068 = vmatpush1.bf16.msra.mxu0 0
      %1069 = vmatprep.subr.bf16.mxu0 0
      %1070 = vmatpush1.bf16.msra.mxu0 0
      %1071 = vmatprep.subr.bf16.mxu0 0
      %1072 = vmatpush1.bf16.msra.mxu0 0
      %1073 = vmatprep.subr.bf16.mxu0 0
      %1074 = vmatpush1.bf16.msra.mxu0 0
      %1075 = vmatprep.subr.bf16.mxu0 0
      %1076 = vmatpush1.bf16.msra.mxu0 0
      %1077 = vmatprep.subr.bf16.mxu0 0
      %1078 = vmatpush1.bf16.msra.mxu0 0
      %1079 = vmatprep.subr.bf16.mxu0 0
      %1080 = vmatpush1.bf16.msra.mxu0 0
      %1081 = vmatprep.subr.bf16.mxu0 0
      %1082 = vmatpush1.bf16.msra.mxu0 0
      %1083 = vmatprep.mubr.bf16.mxu0 0
      %1084 = vmatmul.mubr.bf16.gmra.mrb[0].mxu0 %v1004
      %v1085 = vpop.f32.mrb[0].mxu0
      %v1086 = vadd.f32 0.0, %v1085
      %v1087 = vpop.f32.mrb[0].mxu0
      %v1088 = vpop.f32.mrb[0].mxu0
      %v1089 = vadd.f32 0.0, %v1088
      %v1090 = vpop.f32.mrb[0].mxu0
      %1091 = vmatprep.mubr.bf16.mxu0 0
      %1092 = vmatmul.mubr.bf16.gmra.mrb[0].mxu0 %v1007
      %v1093 = vpop.f32.mrb[0].mxu0
      %v1094 = vadd.f32 0.0, %v1093
      %v1095 = vpop.f32.mrb[0].mxu0
      %v1096 = vpop.f32.mrb[0].mxu0
      %v1097 = vadd.f32 0.0, %v1096
      %v1098 = vpop.f32.mrb[0].mxu0
      %1099 = vmatprep.mubr.bf16.mxu0 0
      %1100 = vmatmul.mubr.bf16.gmra.mrb[0].mxu0 %v1010
      %v1101 = vpop.f32.mrb[0].mxu0
      %v1102 = vadd.f32 0.0, %v1101
      %v1103 = vpop.f32.mrb[0].mxu0
      %v1104 = vpop.f32.mrb[0].mxu0
      %v1105 = vadd.f32 0.0, %v1104
      %v1106 = vpop.f32.mrb[0].mxu0
      %1107 = vmatprep.mubr.bf16.mxu0 0
      %1108 = vmatmul.mubr.bf16.gmra.mrb[0].mxu0 %v1013
      %v1109 = vpop.f32.mrb[0].mxu0
      %v1110 = vadd.f32 0.0, %v1109
      %v1111 = vpop.f32.mrb[0].mxu0
      %v1112 = vpop.f32.mrb[0].mxu0
      %v1113 = vadd.f32 0.0, %v1112
      %v1114 = vpop.f32.mrb[0].mxu0
      %1115 = vmatprep.mubr.bf16.mxu0 0
      %1116 = vmatmul.mubr.bf16.gmra.mrb[0].mxu0 %v1016
      %v1117 = vpop.f32.mrb[0].mxu0
      %v1118 = vadd.f32 0.0, %v1117
      %v1119 = vpop.f32.mrb[0].mxu0
      %v1120 = vpop.f32.mrb[0].mxu0
      %v1121 = vadd.f32 0.0, %v1120
      %v1122 = vpop.f32.mrb[0].mxu0
      %1123 = vmatprep.mubr.bf16.mxu0 0
      %1124 = vmatmul.mubr.bf16.gmra.mrb[0].mxu0 %v1019
      %v1125 = vpop.f32.mrb[0].mxu0
      %v1126 = vadd.f32 0.0, %v1125
      %v1127 = vpop.f32.mrb[0].mxu0
      %v1128 = vpop.f32.mrb[0].mxu0
      %v1129 = vadd.f32 0.0, %v1128
      %v1130 = vpop.f32.mrb[0].mxu0
      %1131 = vmatprep.mubr.bf16.mxu0 0
      %1132 = vmatmul.mubr.bf16.gmra.mrb[0].mxu0 %v1022
      %v1133 = vpop.f32.mrb[0].mxu0
      %v1134 = vadd.f32 0.0, %v1133
      %v1135 = vpop.f32.mrb[0].mxu0
      %v1136 = vpop.f32.mrb[0].mxu0
      %v1137 = vadd.f32 0.0, %v1136
      %v1138 = vpop.f32.mrb[0].mxu0
      %1139 = vmatprep.mubr.bf16.mxu0 0
      %1140 = vmatmul.mubr.bf16.gmra.mrb[0].mxu0 %v1025
      %v1141 = vpop.f32.mrb[0].mxu0
      %v1142 = vadd.f32 0.0, %v1141
      %v1143 = vpop.f32.mrb[0].mxu0
      %v1144 = vpop.f32.mrb[0].mxu0
      %v1145 = vadd.f32 0.0, %v1144
      %v1146 = vpop.f32.mrb[0].mxu0
      %1147 = vmatprep.mubr.bf16.mxu0 0
      %1148 = vmatmul.mubr.bf16.gmra.mrb[0].mxu0 %v1028
      %v1149 = vpop.f32.mrb[0].mxu0
      %v1150 = vadd.f32 0.0, %v1149
      %v1151 = vpop.f32.mrb[0].mxu0
      %v1152 = vpop.f32.mrb[0].mxu0
      %v1153 = vadd.f32 0.0, %v1152
      %v1154 = vpop.f32.mrb[0].mxu0
      %1155 = vmatprep.mubr.bf16.mxu0 0
      %1156 = vmatmul.mubr.bf16.gmra.mrb[0].mxu0 %v1031
      %v1157 = vpop.f32.mrb[0].mxu0
      %v1158 = vadd.f32 0.0, %v1157
      %v1159 = vpop.f32.mrb[0].mxu0
      %v1160 = vpop.f32.mrb[0].mxu0
      %v1161 = vadd.f32 0.0, %v1160
      %v1162 = vpop.f32.mrb[0].mxu0
      %1163 = vmatprep.mubr.bf16.mxu0 0
      %1164 = vmatmul.mubr.bf16.gmra.mrb[0].mxu0 %v1034
      %v1165 = vpop.f32.mrb[0].mxu0
      %v1166 = vadd.f32 0.0, %v1165
      %v1167 = vpop.f32.mrb[0].mxu0
      %v1168 = vpop.f32.mrb[0].mxu0
      %v1169 = vadd.f32 0.0, %v1168
      %v1170 = vpop.f32.mrb[0].mxu0
      %1171 = vmatprep.mubr.bf16.mxu0 0
      %1172 = vmatmul.mubr.bf16.gmra.mrb[0].mxu0 %v1037
      %v1173 = vpop.f32.mrb[0].mxu0
      %v1174 = vadd.f32 0.0, %v1173
      %v1175 = vpop.f32.mrb[0].mxu0
      %v1176 = vpop.f32.mrb[0].mxu0
      %v1177 = vadd.f32 0.0, %v1176
      %v1178 = vpop.f32.mrb[0].mxu0
      %1179 = vmatprep.mubr.bf16.mxu0 0
      %1180 = vmatmul.mubr.bf16.gmra.mrb[0].mxu0 %v1040
      %v1181 = vpop.f32.mrb[0].mxu0
      %v1182 = vadd.f32 0.0, %v1181
      %v1183 = vpop.f32.mrb[0].mxu0
      %v1184 = vpop.f32.mrb[0].mxu0
      %v1185 = vadd.f32 0.0, %v1184
      %v1186 = vpop.f32.mrb[0].mxu0
      %1187 = vmatprep.mubr.bf16.mxu0 0
      %1188 = vmatmul.mubr.bf16.gmra.mrb[0].mxu0 %v1043
      %v1189 = vpop.f32.mrb[0].mxu0
      %v1190 = vadd.f32 0.0, %v1189
      %v1191 = vpop.f32.mrb[0].mxu0
      %v1192 = vpop.f32.mrb[0].mxu0
      %v1193 = vadd.f32 0.0, %v1192
      %v1194 = vpop.f32.mrb[0].mxu0
      %1195 = vmatprep.mubr.bf16.mxu0 0
      %1196 = vmatmul.mubr.bf16.gmra.mrb[0].mxu0 %v1046
      %v1197 = vpop.f32.mrb[0].mxu0
      %v1198 = vadd.f32 0.0, %v1197
      %v1199 = vpop.f32.mrb[0].mxu0
      %v1200 = vpop.f32.mrb[0].mxu0
      %v1201 = vadd.f32 0.0, %v1200
      %v1202 = vpop.f32.mrb[0].mxu0
      %1203 = vmatprep.mubr.bf16.mxu0 0
      %1204 = vmatmul.mubr.bf16.gmra.mrb[0].mxu0 %v1049
      %v1205 = vpop.f32.mrb[0].mxu0
      %v1206 = vadd.f32 0.0, %v1205
      %v1207 = vpop.f32.mrb[0].mxu0
      %v1208 = vpop.f32.mrb[0].mxu0
      %v1209 = vadd.f32 0.0, %v1208
      %v1210 = vpop.f32.mrb[0].mxu0
      %1211 = vdwg.mxu0
      %v1212 = vmax.f32 %v1086, 0.0
      %v1213 = vmax.f32 %v1089, 0.0
      %v1214 = vmax.f32 %v1094, 0.0
      %v1215 = vmax.f32 %v1097, 0.0
      %v1216 = vmax.f32 %v1102, 0.0
      %v1217 = vmax.f32 %v1105, 0.0
      %v1218 = vmax.f32 %v1110, 0.0
      %v1219 = vmax.f32 %v1113, 0.0
      %v1220 = vmax.f32 %v1118, 0.0
      %v1221 = vmax.f32 %v1121, 0.0
      %v1222 = vmax.f32 %v1126, 0.0
      %v1223 = vmax.f32 %v1129, 0.0
      %v1224 = vmax.f32 %v1134, 0.0
      %v1225 = vmax.f32 %v1137, 0.0
      %v1226 = vmax.f32 %v1142, 0.0
      %v1227 = vmax.f32 %v1145, 0.0
      %v1228 = vmax.f32 %v1150, 0.0
      %v1229 = vmax.f32 %v1153, 0.0
      %v1230 = vmax.f32 %v1158, 0.0
      %v1231 = vmax.f32 %v1161, 0.0
      %v1232 = vmax.f32 %v1166, 0.0
      %v1233 = vmax.f32 %v1169, 0.0
      %v1234 = vmax.f32 %v1174, 0.0
      %v1235 = vmax.f32 %v1177, 0.0
      %v1236 = vmax.f32 %v1182, 0.0
      %v1237 = vmax.f32 %v1185, 0.0
      %v1238 = vmax.f32 %v1190, 0.0
      %v1239 = vmax.f32 %v1193, 0.0
      %v1240 = vmax.f32 %v1198, 0.0
      %v1241 = vmax.f32 %v1201, 0.0
      %v1242 = vmax.f32 %v1206, 0.0
      %v1243 = vmax.f32 %v1209, 0.0
      %v1244 = vpack.c.bf16 %v1213, %v1212
      %v1245 = vpack.c.bf16 %v1215, %v1214
      %v1246 = vpack.c.bf16 %v1217, %v1216
      %v1247 = vpack.c.bf16 %v1219, %v1218
      %v1248 = vpack.c.bf16 %v1221, %v1220
      %v1249 = vpack.c.bf16 %v1223, %v1222
      %v1250 = vpack.c.bf16 %v1225, %v1224
      %v1251 = vpack.c.bf16 %v1227, %v1226
      %v1252 = vpack.c.bf16 %v1229, %v1228
      %v1253 = vpack.c.bf16 %v1231, %v1230
      %v1254 = vpack.c.bf16 %v1233, %v1232
      %v1255 = vpack.c.bf16 %v1235, %v1234
      %v1256 = vpack.c.bf16 %v1237, %v1236
      %v1257 = vpack.c.bf16 %v1239, %v1238
      %v1258 = vpack.c.bf16 %v1241, %v1240
      %v1259 = vpack.c.bf16 %v1243, %v1242
      %s1260 = scalar_lea.vmem %s1, 32
      %v1261 = vld [vmem:[%s1260] sm:$0xf]
      %v1262 = vld [vmem:[%s1260 + $0x4] sm:$0xf]
      %v1265 = vunpack.c.l.b16 %v1261
      %v1266 = vunpack.c.l.b16 %v1262
      %v1267 = vpack.c.b16 %v1266, %v1265
      %v1270 = vsel %vm204, %v1244, 0
      %v1273 = vsel %vm204, %v1245, 0
      %v1276 = vsel %vm204, %v1246, 0
      %v1279 = vsel %vm204, %v1247, 0
      %v1282 = vsel %vm204, %v1248, 0
      %v1285 = vsel %vm204, %v1249, 0
      %v1288 = vsel %vm204, %v1250, 0
      %v1291 = vsel %vm204, %v1251, 0
      %v1294 = vsel %vm204, %v1252, 0
      %v1297 = vsel %vm204, %v1253, 0
      %v1300 = vsel %vm204, %v1254, 0
      %v1303 = vsel %vm204, %v1255, 0
      %v1306 = vsel %vm204, %v1256, 0
      %v1309 = vsel %vm204, %v1257, 0
      %v1312 = vsel %vm204, %v1258, 0
      %v1315 = vsel %vm204, %v1259, 0
      %1317 = vmatprep.subr.bf16.mxu0 0
      %1318 = vmatpush1.bf16.msra.mxu0 %v1267
      %1319 = vmatprep.subr.bf16.mxu0 0
      %1320 = vmatpush1.bf16.msra.mxu0 0
      %1321 = vmatprep.subr.bf16.mxu0 0
      %1322 = vmatpush1.bf16.msra.mxu0 0
      %1323 = vmatprep.subr.bf16.mxu0 0
      %1324 = vmatpush1.bf16.msra.mxu0 0
      %1325 = vmatprep.subr.bf16.mxu0 0
      %1326 = vmatpush1.bf16.msra.mxu0 0
      %1327 = vmatprep.subr.bf16.mxu0 0
      %1328 = vmatpush1.bf16.msra.mxu0 0
      %1329 = vmatprep.subr.bf16.mxu0 0
      %1330 = vmatpush1.bf16.msra.mxu0 0
      %1331 = vmatprep.subr.bf16.mxu0 0
      %1332 = vmatpush1.bf16.msra.mxu0 0
      %1333 = vmatprep.subr.bf16.mxu0 0
      %1334 = vmatpush1.bf16.msra.mxu0 0
      %1335 = vmatprep.subr.bf16.mxu0 0
      %1336 = vmatpush1.bf16.msra.mxu0 0
      %1337 = vmatprep.subr.bf16.mxu0 0
      %1338 = vmatpush1.bf16.msra.mxu0 0
      %1339 = vmatprep.subr.bf16.mxu0 0
      %1340 = vmatpush1.bf16.msra.mxu0 0
      %1341 = vmatprep.subr.bf16.mxu0 0
      %1342 = vmatpush1.bf16.msra.mxu0 0
      %1343 = vmatprep.subr.bf16.mxu0 0
      %1344 = vmatpush1.bf16.msra.mxu0 0
      %1345 = vmatprep.subr.bf16.mxu0 0
      %1346 = vmatpush1.bf16.msra.mxu0 0
      %1347 = vmatprep.subr.bf16.mxu0 0
      %1348 = vmatpush1.bf16.msra.mxu0 0
      %1349 = vmatprep.mubr.bf16.mxu0 0
      %1350 = vmatmul.mubr.bf16.gmra.mrb[0].mxu0 %v1270
      %v1351 = vpop.f32.mrb[0].mxu0
      %v1352 = vadd.f32 0.0, %v1351
      %v1353 = vpop.f32.mrb[0].mxu0
      %v1354 = vpop.f32.mrb[0].mxu0
      %v1355 = vadd.f32 0.0, %v1354
      %v1356 = vpop.f32.mrb[0].mxu0
      %1357 = vmatprep.mubr.bf16.mxu0 0
      %1358 = vmatmul.mubr.bf16.gmra.mrb[0].mxu0 %v1273
      %v1359 = vpop.f32.mrb[0].mxu0
      %v1360 = vadd.f32 0.0, %v1359
      %v1361 = vpop.f32.mrb[0].mxu0
      %v1362 = vpop.f32.mrb[0].mxu0
      %v1363 = vadd.f32 0.0, %v1362
      %v1364 = vpop.f32.mrb[0].mxu0
      %1365 = vmatprep.mubr.bf16.mxu0 0
      %1366 = vmatmul.mubr.bf16.gmra.mrb[0].mxu0 %v1276
      %v1367 = vpop.f32.mrb[0].mxu0
      %v1368 = vadd.f32 0.0, %v1367
      %v1369 = vpop.f32.mrb[0].mxu0
      %v1370 = vpop.f32.mrb[0].mxu0
      %v1371 = vadd.f32 0.0, %v1370
      %v1372 = vpop.f32.mrb[0].mxu0
      %1373 = vmatprep.mubr.bf16.mxu0 0
      %1374 = vmatmul.mubr.bf16.gmra.mrb[0].mxu0 %v1279
      %v1375 = vpop.f32.mrb[0].mxu0
      %v1376 = vadd.f32 0.0, %v1375
      %v1377 = vpop.f32.mrb[0].mxu0
      %v1378 = vpop.f32.mrb[0].mxu0
      %v1379 = vadd.f32 0.0, %v1378
      %v1380 = vpop.f32.mrb[0].mxu0
      %1381 = vmatprep.mubr.bf16.mxu0 0
      %1382 = vmatmul.mubr.bf16.gmra.mrb[0].mxu0 %v1282
      %v1383 = vpop.f32.mrb[0].mxu0
      %v1384 = vadd.f32 0.0, %v1383
      %v1385 = vpop.f32.mrb[0].mxu0
      %v1386 = vpop.f32.mrb[0].mxu0
      %v1387 = vadd.f32 0.0, %v1386
      %v1388 = vpop.f32.mrb[0].mxu0
      %1389 = vmatprep.mubr.bf16.mxu0 0
      %1390 = vmatmul.mubr.bf16.gmra.mrb[0].mxu0 %v1285
      %v1391 = vpop.f32.mrb[0].mxu0
      %v1392 = vadd.f32 0.0, %v1391
      %v1393 = vpop.f32.mrb[0].mxu0
      %v1394 = vpop.f32.mrb[0].mxu0
      %v1395 = vadd.f32 0.0, %v1394
      %v1396 = vpop.f32.mrb[0].mxu0
      %1397 = vmatprep.mubr.bf16.mxu0 0
      %1398 = vmatmul.mubr.bf16.gmra.mrb[0].mxu0 %v1288
      %v1399 = vpop.f32.mrb[0].mxu0
      %v1400 = vadd.f32 0.0, %v1399
      %v1401 = vpop.f32.mrb[0].mxu0
      %v1402 = vpop.f32.mrb[0].mxu0
      %v1403 = vadd.f32 0.0, %v1402
      %v1404 = vpop.f32.mrb[0].mxu0
      %1405 = vmatprep.mubr.bf16.mxu0 0
      %1406 = vmatmul.mubr.bf16.gmra.mrb[0].mxu0 %v1291
      %v1407 = vpop.f32.mrb[0].mxu0
      %v1408 = vadd.f32 0.0, %v1407
      %v1409 = vpop.f32.mrb[0].mxu0
      %v1410 = vpop.f32.mrb[0].mxu0
      %v1411 = vadd.f32 0.0, %v1410
      %v1412 = vpop.f32.mrb[0].mxu0
      %1413 = vmatprep.mubr.bf16.mxu0 0
      %1414 = vmatmul.mubr.bf16.gmra.mrb[0].mxu0 %v1294
      %v1415 = vpop.f32.mrb[0].mxu0
      %v1416 = vadd.f32 0.0, %v1415
      %v1417 = vpop.f32.mrb[0].mxu0
      %v1418 = vpop.f32.mrb[0].mxu0
      %v1419 = vadd.f32 0.0, %v1418
      %v1420 = vpop.f32.mrb[0].mxu0
      %1421 = vmatprep.mubr.bf16.mxu0 0
      %1422 = vmatmul.mubr.bf16.gmra.mrb[0].mxu0 %v1297
      %v1423 = vpop.f32.mrb[0].mxu0
      %v1424 = vadd.f32 0.0, %v1423
      %v1425 = vpop.f32.mrb[0].mxu0
      %v1426 = vpop.f32.mrb[0].mxu0
      %v1427 = vadd.f32 0.0, %v1426
      %v1428 = vpop.f32.mrb[0].mxu0
      %1429 = vmatprep.mubr.bf16.mxu0 0
      %1430 = vmatmul.mubr.bf16.gmra.mrb[0].mxu0 %v1300
      %v1431 = vpop.f32.mrb[0].mxu0
      %v1432 = vadd.f32 0.0, %v1431
      %v1433 = vpop.f32.mrb[0].mxu0
      %v1434 = vpop.f32.mrb[0].mxu0
      %v1435 = vadd.f32 0.0, %v1434
      %v1436 = vpop.f32.mrb[0].mxu0
      %1437 = vmatprep.mubr.bf16.mxu0 0
      %1438 = vmatmul.mubr.bf16.gmra.mrb[0].mxu0 %v1303
      %v1439 = vpop.f32.mrb[0].mxu0
      %v1440 = vadd.f32 0.0, %v1439
      %v1441 = vpop.f32.mrb[0].mxu0
      %v1442 = vpop.f32.mrb[0].mxu0
      %v1443 = vadd.f32 0.0, %v1442
      %v1444 = vpop.f32.mrb[0].mxu0
      %1445 = vmatprep.mubr.bf16.mxu0 0
      %1446 = vmatmul.mubr.bf16.gmra.mrb[0].mxu0 %v1306
      %v1447 = vpop.f32.mrb[0].mxu0
      %v1448 = vadd.f32 0.0, %v1447
      %v1449 = vpop.f32.mrb[0].mxu0
      %v1450 = vpop.f32.mrb[0].mxu0
      %v1451 = vadd.f32 0.0, %v1450
      %v1452 = vpop.f32.mrb[0].mxu0
      %1453 = vmatprep.mubr.bf16.mxu0 0
      %1454 = vmatmul.mubr.bf16.gmra.mrb[0].mxu0 %v1309
      %v1455 = vpop.f32.mrb[0].mxu0
      %v1456 = vadd.f32 0.0, %v1455
      %v1457 = vpop.f32.mrb[0].mxu0
      %v1458 = vpop.f32.mrb[0].mxu0
      %v1459 = vadd.f32 0.0, %v1458
      %v1460 = vpop.f32.mrb[0].mxu0
      %1461 = vmatprep.mubr.bf16.mxu0 0
      %1462 = vmatmul.mubr.bf16.gmra.mrb[0].mxu0 %v1312
      %v1463 = vpop.f32.mrb[0].mxu0
      %v1464 = vadd.f32 0.0, %v1463
      %v1465 = vpop.f32.mrb[0].mxu0
      %v1466 = vpop.f32.mrb[0].mxu0
      %v1467 = vadd.f32 0.0, %v1466
      %v1468 = vpop.f32.mrb[0].mxu0
      %1469 = vmatprep.mubr.bf16.mxu0 0
      %1470 = vmatmul.mubr.bf16.gmra.mrb[0].mxu0 %v1315
      %v1471 = vpop.f32.mrb[0].mxu0
      %v1472 = vadd.f32 0.0, %v1471
      %v1473 = vpop.f32.mrb[0].mxu0
      %v1474 = vpop.f32.mrb[0].mxu0
      %v1475 = vadd.f32 0.0, %v1474
      %v1476 = vpop.f32.mrb[0].mxu0
      %1477 = vdwg.mxu0
      %v1478 = vmax.f32 %v1352, 0.0
      %v1479 = vmax.f32 %v1355, 0.0
      %v1480 = vmax.f32 %v1360, 0.0
      %v1481 = vmax.f32 %v1363, 0.0
      %v1482 = vmax.f32 %v1368, 0.0
      %v1483 = vmax.f32 %v1371, 0.0
      %v1484 = vmax.f32 %v1376, 0.0
      %v1485 = vmax.f32 %v1379, 0.0
      %v1486 = vmax.f32 %v1384, 0.0
      %v1487 = vmax.f32 %v1387, 0.0
      %v1488 = vmax.f32 %v1392, 0.0
      %v1489 = vmax.f32 %v1395, 0.0
      %v1490 = vmax.f32 %v1400, 0.0
      %v1491 = vmax.f32 %v1403, 0.0
      %v1492 = vmax.f32 %v1408, 0.0
      %v1493 = vmax.f32 %v1411, 0.0
      %v1494 = vmax.f32 %v1416, 0.0
      %v1495 = vmax.f32 %v1419, 0.0
      %v1496 = vmax.f32 %v1424, 0.0
      %v1497 = vmax.f32 %v1427, 0.0
      %v1498 = vmax.f32 %v1432, 0.0
      %v1499 = vmax.f32 %v1435, 0.0
      %v1500 = vmax.f32 %v1440, 0.0
      %v1501 = vmax.f32 %v1443, 0.0
      %v1502 = vmax.f32 %v1448, 0.0
      %v1503 = vmax.f32 %v1451, 0.0
      %v1504 = vmax.f32 %v1456, 0.0
      %v1505 = vmax.f32 %v1459, 0.0
      %v1506 = vmax.f32 %v1464, 0.0
      %v1507 = vmax.f32 %v1467, 0.0
      %v1508 = vmax.f32 %v1472, 0.0
      %v1509 = vmax.f32 %v1475, 0.0
      %v1510 = vpack.c.bf16 %v1479, %v1478
      %v1511 = vpack.c.bf16 %v1481, %v1480
      %v1512 = vpack.c.bf16 %v1483, %v1482
      %v1513 = vpack.c.bf16 %v1485, %v1484
      %v1514 = vpack.c.bf16 %v1487, %v1486
      %v1515 = vpack.c.bf16 %v1489, %v1488
      %v1516 = vpack.c.bf16 %v1491, %v1490
      %v1517 = vpack.c.bf16 %v1493, %v1492
      %v1518 = vpack.c.bf16 %v1495, %v1494
      %v1519 = vpack.c.bf16 %v1497, %v1496
      %v1520 = vpack.c.bf16 %v1499, %v1498
      %v1521 = vpack.c.bf16 %v1501, %v1500
      %v1522 = vpack.c.bf16 %v1503, %v1502
      %v1523 = vpack.c.bf16 %v1505, %v1504
      %v1524 = vpack.c.bf16 %v1507, %v1506
      %v1525 = vpack.c.bf16 %v1509, %v1508
      %s1526 = scalar_lea.vmem %s1, 40
      %v1527 = vld [vmem:[%s1526] sm:$0xf]
      %v1528 = vld [vmem:[%s1526 + $0x4] sm:$0xf]
      %v1531 = vunpack.c.l.b16 %v1527
      %v1532 = vunpack.c.l.b16 %v1528
      %v1533 = vpack.c.b16 %v1532, %v1531
      %v1536 = vsel %vm204, %v1510, 0
      %v1539 = vsel %vm204, %v1511, 0
      %v1542 = vsel %vm204, %v1512, 0
      %v1545 = vsel %vm204, %v1513, 0
      %v1548 = vsel %vm204, %v1514, 0
      %v1551 = vsel %vm204, %v1515, 0
      %v1554 = vsel %vm204, %v1516, 0
      %v1557 = vsel %vm204, %v1517, 0
      %v1560 = vsel %vm204, %v1518, 0
      %v1563 = vsel %vm204, %v1519, 0
      %v1566 = vsel %vm204, %v1520, 0
      %v1569 = vsel %vm204, %v1521, 0
      %v1572 = vsel %vm204, %v1522, 0
      %v1575 = vsel %vm204, %v1523, 0
      %v1578 = vsel %vm204, %v1524, 0
      %v1581 = vsel %vm204, %v1525, 0
      %1583 = vmatprep.subr.bf16.mxu0 0
      %1584 = vmatpush1.bf16.msra.mxu0 %v1533
      %1585 = vmatprep.subr.bf16.mxu0 0
      %1586 = vmatpush1.bf16.msra.mxu0 0
      %1587 = vmatprep.subr.bf16.mxu0 0
      %1588 = vmatpush1.bf16.msra.mxu0 0
      %1589 = vmatprep.subr.bf16.mxu0 0
      %1590 = vmatpush1.bf16.msra.mxu0 0
      %1591 = vmatprep.subr.bf16.mxu0 0
      %1592 = vmatpush1.bf16.msra.mxu0 0
      %1593 = vmatprep.subr.bf16.mxu0 0
      %1594 = vmatpush1.bf16.msra.mxu0 0
      %1595 = vmatprep.subr.bf16.mxu0 0
      %1596 = vmatpush1.bf16.msra.mxu0 0
      %1597 = vmatprep.subr.bf16.mxu0 0
      %1598 = vmatpush1.bf16.msra.mxu0 0
      %1599 = vmatprep.subr.bf16.mxu0 0
      %1600 = vmatpush1.bf16.msra.mxu0 0
      %1601 = vmatprep.subr.bf16.mxu0 0
      %1602 = vmatpush1.bf16.msra.mxu0 0
      %1603 = vmatprep.subr.bf16.mxu0 0
      %1604 = vmatpush1.bf16.msra.mxu0 0
      %1605 = vmatprep.subr.bf16.mxu0 0
      %1606 = vmatpush1.bf16.msra.mxu0 0
      %1607 = vmatprep.subr.bf16.mxu0 0
      %1608 = vmatpush1.bf16.msra.mxu0 0
      %1609 = vmatprep.subr.bf16.mxu0 0
      %1610 = vmatpush1.bf16.msra.mxu0 0
      %1611 = vmatprep.subr.bf16.mxu0 0
      %1612 = vmatpush1.bf16.msra.mxu0 0
      %1613 = vmatprep.subr.bf16.mxu0 0
      %1614 = vmatpush1.bf16.msra.mxu0 0
      %1615 = vmatprep.mubr.bf16.mxu0 0
      %1616 = vmatmul.mubr.bf16.gmra.mrb[0].mxu0 %v1536
      %v1617 = vpop.f32.mrb[0].mxu0
      %v1618 = vadd.f32 0.0, %v1617
      %v1619 = vpop.f32.mrb[0].mxu0
      %v1620 = vpop.f32.mrb[0].mxu0
      %v1621 = vadd.f32 0.0, %v1620
      %v1622 = vpop.f32.mrb[0].mxu0
      %1623 = vmatprep.mubr.bf16.mxu0 0
      %1624 = vmatmul.mubr.bf16.gmra.mrb[0].mxu0 %v1539
      %v1625 = vpop.f32.mrb[0].mxu0
      %v1626 = vadd.f32 0.0, %v1625
      %v1627 = vpop.f32.mrb[0].mxu0
      %v1628 = vpop.f32.mrb[0].mxu0
      %v1629 = vadd.f32 0.0, %v1628
      %v1630 = vpop.f32.mrb[0].mxu0
      %1631 = vmatprep.mubr.bf16.mxu0 0
      %1632 = vmatmul.mubr.bf16.gmra.mrb[0].mxu0 %v1542
      %v1633 = vpop.f32.mrb[0].mxu0
      %v1634 = vadd.f32 0.0, %v1633
      %v1635 = vpop.f32.mrb[0].mxu0
      %v1636 = vpop.f32.mrb[0].mxu0
      %v1637 = vadd.f32 0.0, %v1636
      %v1638 = vpop.f32.mrb[0].mxu0
      %1639 = vmatprep.mubr.bf16.mxu0 0
      %1640 = vmatmul.mubr.bf16.gmra.mrb[0].mxu0 %v1545
      %v1641 = vpop.f32.mrb[0].mxu0
      %v1642 = vadd.f32 0.0, %v1641
      %v1643 = vpop.f32.mrb[0].mxu0
      %v1644 = vpop.f32.mrb[0].mxu0
      %v1645 = vadd.f32 0.0, %v1644
      %v1646 = vpop.f32.mrb[0].mxu0
      %1647 = vmatprep.mubr.bf16.mxu0 0
      %1648 = vmatmul.mubr.bf16.gmra.mrb[0].mxu0 %v1548
      %v1649 = vpop.f32.mrb[0].mxu0
      %v1650 = vadd.f32 0.0, %v1649
      %v1651 = vpop.f32.mrb[0].mxu0
      %v1652 = vpop.f32.mrb[0].mxu0
      %v1653 = vadd.f32 0.0, %v1652
      %v1654 = vpop.f32.mrb[0].mxu0
      %1655 = vmatprep.mubr.bf16.mxu0 0
      %1656 = vmatmul.mubr.bf16.gmra.mrb[0].mxu0 %v1551
      %v1657 = vpop.f32.mrb[0].mxu0
      %v1658 = vadd.f32 0.0, %v1657
      %v1659 = vpop.f32.mrb[0].mxu0
      %v1660 = vpop.f32.mrb[0].mxu0
      %v1661 = vadd.f32 0.0, %v1660
      %v1662 = vpop.f32.mrb[0].mxu0
      %1663 = vmatprep.mubr.bf16.mxu0 0
      %1664 = vmatmul.mubr.bf16.gmra.mrb[0].mxu0 %v1554
      %v1665 = vpop.f32.mrb[0].mxu0
      %v1666 = vadd.f32 0.0, %v1665
      %v1667 = vpop.f32.mrb[0].mxu0
      %v1668 = vpop.f32.mrb[0].mxu0
      %v1669 = vadd.f32 0.0, %v1668
      %v1670 = vpop.f32.mrb[0].mxu0
      %1671 = vmatprep.mubr.bf16.mxu0 0
      %1672 = vmatmul.mubr.bf16.gmra.mrb[0].mxu0 %v1557
      %v1673 = vpop.f32.mrb[0].mxu0
      %v1674 = vadd.f32 0.0, %v1673
      %v1675 = vpop.f32.mrb[0].mxu0
      %v1676 = vpop.f32.mrb[0].mxu0
      %v1677 = vadd.f32 0.0, %v1676
      %v1678 = vpop.f32.mrb[0].mxu0
      %1679 = vmatprep.mubr.bf16.mxu0 0
      %1680 = vmatmul.mubr.bf16.gmra.mrb[0].mxu0 %v1560
      %v1681 = vpop.f32.mrb[0].mxu0
      %v1682 = vadd.f32 0.0, %v1681
      %v1683 = vpop.f32.mrb[0].mxu0
      %v1684 = vpop.f32.mrb[0].mxu0
      %v1685 = vadd.f32 0.0, %v1684
      %v1686 = vpop.f32.mrb[0].mxu0
      %1687 = vmatprep.mubr.bf16.mxu0 0
      %1688 = vmatmul.mubr.bf16.gmra.mrb[0].mxu0 %v1563
      %v1689 = vpop.f32.mrb[0].mxu0
      %v1690 = vadd.f32 0.0, %v1689
      %v1691 = vpop.f32.mrb[0].mxu0
      %v1692 = vpop.f32.mrb[0].mxu0
      %v1693 = vadd.f32 0.0, %v1692
      %v1694 = vpop.f32.mrb[0].mxu0
      %1695 = vmatprep.mubr.bf16.mxu0 0
      %1696 = vmatmul.mubr.bf16.gmra.mrb[0].mxu0 %v1566
      %v1697 = vpop.f32.mrb[0].mxu0
      %v1698 = vadd.f32 0.0, %v1697
      %v1699 = vpop.f32.mrb[0].mxu0
      %v1700 = vpop.f32.mrb[0].mxu0
      %v1701 = vadd.f32 0.0, %v1700
      %v1702 = vpop.f32.mrb[0].mxu0
      %1703 = vmatprep.mubr.bf16.mxu0 0
      %1704 = vmatmul.mubr.bf16.gmra.mrb[0].mxu0 %v1569
      %v1705 = vpop.f32.mrb[0].mxu0
      %v1706 = vadd.f32 0.0, %v1705
      %v1707 = vpop.f32.mrb[0].mxu0
      %v1708 = vpop.f32.mrb[0].mxu0
      %v1709 = vadd.f32 0.0, %v1708
      %v1710 = vpop.f32.mrb[0].mxu0
      %1711 = vmatprep.mubr.bf16.mxu0 0
      %1712 = vmatmul.mubr.bf16.gmra.mrb[0].mxu0 %v1572
      %v1713 = vpop.f32.mrb[0].mxu0
      %v1714 = vadd.f32 0.0, %v1713
      %v1715 = vpop.f32.mrb[0].mxu0
      %v1716 = vpop.f32.mrb[0].mxu0
      %v1717 = vadd.f32 0.0, %v1716
      %v1718 = vpop.f32.mrb[0].mxu0
      %1719 = vmatprep.mubr.bf16.mxu0 0
      %1720 = vmatmul.mubr.bf16.gmra.mrb[0].mxu0 %v1575
      %v1721 = vpop.f32.mrb[0].mxu0
      %v1722 = vadd.f32 0.0, %v1721
      %v1723 = vpop.f32.mrb[0].mxu0
      %v1724 = vpop.f32.mrb[0].mxu0
      %v1725 = vadd.f32 0.0, %v1724
      %v1726 = vpop.f32.mrb[0].mxu0
      %1727 = vmatprep.mubr.bf16.mxu0 0
      %1728 = vmatmul.mubr.bf16.gmra.mrb[0].mxu0 %v1578
      %v1729 = vpop.f32.mrb[0].mxu0
      %v1730 = vadd.f32 0.0, %v1729
      %v1731 = vpop.f32.mrb[0].mxu0
      %v1732 = vpop.f32.mrb[0].mxu0
      %v1733 = vadd.f32 0.0, %v1732
      %v1734 = vpop.f32.mrb[0].mxu0
      %1735 = vmatprep.mubr.bf16.mxu0 0
      %1736 = vmatmul.mubr.bf16.gmra.mrb[0].mxu0 %v1581
      %v1737 = vpop.f32.mrb[0].mxu0
      %v1738 = vadd.f32 0.0, %v1737
      %v1739 = vpop.f32.mrb[0].mxu0
      %v1740 = vpop.f32.mrb[0].mxu0
      %v1741 = vadd.f32 0.0, %v1740
      %v1742 = vpop.f32.mrb[0].mxu0
      %1743 = vdwg.mxu0
      %v1744 = vxor.u32 %v1618, 2147483648
      %v1745 = vxor.u32 %v1621, 2147483648
      %v1746 = vxor.u32 %v1626, 2147483648
      %v1747 = vxor.u32 %v1629, 2147483648
      %v1748 = vxor.u32 %v1634, 2147483648
      %v1749 = vxor.u32 %v1637, 2147483648
      %v1750 = vxor.u32 %v1642, 2147483648
      %v1751 = vxor.u32 %v1645, 2147483648
      %v1752 = vxor.u32 %v1650, 2147483648
      %v1753 = vxor.u32 %v1653, 2147483648
      %v1754 = vxor.u32 %v1658, 2147483648
      %v1755 = vxor.u32 %v1661, 2147483648
      %v1756 = vxor.u32 %v1666, 2147483648
      %v1757 = vxor.u32 %v1669, 2147483648
      %v1758 = vxor.u32 %v1674, 2147483648
      %v1759 = vxor.u32 %v1677, 2147483648
      %v1760 = vxor.u32 %v1682, 2147483648
      %v1761 = vxor.u32 %v1685, 2147483648
      %v1762 = vxor.u32 %v1690, 2147483648
      %v1763 = vxor.u32 %v1693, 2147483648
      %v1764 = vxor.u32 %v1698, 2147483648
      %v1765 = vxor.u32 %v1701, 2147483648
      %v1766 = vxor.u32 %v1706, 2147483648
      %v1767 = vxor.u32 %v1709, 2147483648
      %v1768 = vxor.u32 %v1714, 2147483648
      %v1769 = vxor.u32 %v1717, 2147483648
      %v1770 = vxor.u32 %v1722, 2147483648
      %v1771 = vxor.u32 %v1725, 2147483648
      %v1772 = vxor.u32 %v1730, 2147483648
      %v1773 = vxor.u32 %v1733, 2147483648
      %v1774 = vxor.u32 %v1738, 2147483648
      %v1775 = vxor.u32 %v1741, 2147483648
      %v1776 = vmul.f32 %v1744, 1.442695
      %v1777 = vpow.pop %v1776
      %v1778 = vmul.f32 %v1745, 1.442695
      %v1779 = vpow.pop %v1778
      %v1780 = vmul.f32 %v1746, 1.442695
      %v1781 = vpow.pop %v1780
      %v1782 = vmul.f32 %v1747, 1.442695
      %v1783 = vpow.pop %v1782
      %v1784 = vmul.f32 %v1748, 1.442695
      %v1785 = vpow.pop %v1784
      %v1786 = vmul.f32 %v1749, 1.442695
      %v1787 = vpow.pop %v1786
      %v1788 = vmul.f32 %v1750, 1.442695
      %v1789 = vpow.pop %v1788
      %v1790 = vmul.f32 %v1751, 1.442695
      %v1791 = vpow.pop %v1790
      %v1792 = vmul.f32 %v1752, 1.442695
      %v1793 = vpow.pop %v1792
      %v1794 = vmul.f32 %v1753, 1.442695
      %v1795 = vpow.pop %v1794
      %v1796 = vmul.f32 %v1754, 1.442695
      %v1797 = vpow.pop %v1796
      %v1798 = vmul.f32 %v1755, 1.442695
      %v1799 = vpow.pop %v1798
      %v1800 = vmul.f32 %v1756, 1.442695
      %v1801 = vpow.pop %v1800
      %v1802 = vmul.f32 %v1757, 1.442695
      %v1803 = vpow.pop %v1802
      %v1804 = vmul.f32 %v1758, 1.442695
      %v1805 = vpow.pop %v1804
      %v1806 = vmul.f32 %v1759, 1.442695
      %v1807 = vpow.pop %v1806
      %v1808 = vmul.f32 %v1760, 1.442695
      %v1809 = vpow.pop %v1808
      %v1810 = vmul.f32 %v1761, 1.442695
      %v1811 = vpow.pop %v1810
      %v1812 = vmul.f32 %v1762, 1.442695
      %v1813 = vpow.pop %v1812
      %v1814 = vmul.f32 %v1763, 1.442695
      %v1815 = vpow.pop %v1814
      %v1816 = vmul.f32 %v1764, 1.442695
      %v1817 = vpow.pop %v1816
      %v1818 = vmul.f32 %v1765, 1.442695
      %v1819 = vpow.pop %v1818
      %v1820 = vmul.f32 %v1766, 1.442695
      %v1821 = vpow.pop %v1820
      %v1822 = vmul.f32 %v1767, 1.442695
      %v1823 = vpow.pop %v1822
      %v1824 = vmul.f32 %v1768, 1.442695
      %v1825 = vpow.pop %v1824
      %v1826 = vmul.f32 %v1769, 1.442695
      %v1827 = vpow.pop %v1826
      %v1828 = vmul.f32 %v1770, 1.442695
      %v1829 = vpow.pop %v1828
      %v1830 = vmul.f32 %v1771, 1.442695
      %v1831 = vpow.pop %v1830
      %v1832 = vmul.f32 %v1772, 1.442695
      %v1833 = vpow.pop %v1832
      %v1834 = vmul.f32 %v1773, 1.442695
      %v1835 = vpow.pop %v1834
      %v1836 = vmul.f32 %v1774, 1.442695
      %v1837 = vpow.pop %v1836
      %v1838 = vmul.f32 %v1775, 1.442695
      %v1839 = vpow.pop %v1838
      %v1840 = vadd.f32 %v1777, 1.0
      %v1841 = vadd.f32 %v1779, 1.0
      %v1842 = vadd.f32 %v1781, 1.0
      %v1843 = vadd.f32 %v1783, 1.0
      %v1844 = vadd.f32 %v1785, 1.0
      %v1845 = vadd.f32 %v1787, 1.0
      %v1846 = vadd.f32 %v1789, 1.0
      %v1847 = vadd.f32 %v1791, 1.0
      %v1848 = vadd.f32 %v1793, 1.0
      %v1849 = vadd.f32 %v1795, 1.0
      %v1850 = vadd.f32 %v1797, 1.0
      %v1851 = vadd.f32 %v1799, 1.0
      %v1852 = vadd.f32 %v1801, 1.0
      %v1853 = vadd.f32 %v1803, 1.0
      %v1854 = vadd.f32 %v1805, 1.0
      %v1855 = vadd.f32 %v1807, 1.0
      %v1856 = vadd.f32 %v1809, 1.0
      %v1857 = vadd.f32 %v1811, 1.0
      %v1858 = vadd.f32 %v1813, 1.0
      %v1859 = vadd.f32 %v1815, 1.0
      %v1860 = vadd.f32 %v1817, 1.0
      %v1861 = vadd.f32 %v1819, 1.0
      %v1862 = vadd.f32 %v1821, 1.0
      %v1863 = vadd.f32 %v1823, 1.0
      %v1864 = vadd.f32 %v1825, 1.0
      %v1865 = vadd.f32 %v1827, 1.0
      %v1866 = vadd.f32 %v1829, 1.0
      %v1867 = vadd.f32 %v1831, 1.0
      %v1868 = vadd.f32 %v1833, 1.0
      %v1869 = vadd.f32 %v1835, 1.0
      %v1870 = vadd.f32 %v1837, 1.0
      %v1871 = vadd.f32 %v1839, 1.0
      %v1872 = vrcp.pop %v1840
      %v1873 = vmul.f32 1.0, %v1872
      %v1874 = vrcp.pop %v1841
      %v1875 = vmul.f32 1.0, %v1874
      %v1876 = vrcp.pop %v1842
      %v1877 = vmul.f32 1.0, %v1876
      %v1878 = vrcp.pop %v1843
      %v1879 = vmul.f32 1.0, %v1878
      %v1880 = vrcp.pop %v1844
      %v1881 = vmul.f32 1.0, %v1880
      %v1882 = vrcp.pop %v1845
      %v1883 = vmul.f32 1.0, %v1882
      %v1884 = vrcp.pop %v1846
      %v1885 = vmul.f32 1.0, %v1884
      %v1886 = vrcp.pop %v1847
      %v1887 = vmul.f32 1.0, %v1886
      %v1888 = vrcp.pop %v1848
      %v1889 = vmul.f32 1.0, %v1888
      %v1890 = vrcp.pop %v1849
      %v1891 = vmul.f32 1.0, %v1890
      %v1892 = vrcp.pop %v1850
      %v1893 = vmul.f32 1.0, %v1892
      %v1894 = vrcp.pop %v1851
      %v1895 = vmul.f32 1.0, %v1894
      %v1896 = vrcp.pop %v1852
      %v1897 = vmul.f32 1.0, %v1896
      %v1898 = vrcp.pop %v1853
      %v1899 = vmul.f32 1.0, %v1898
      %v1900 = vrcp.pop %v1854
      %v1901 = vmul.f32 1.0, %v1900
      %v1902 = vrcp.pop %v1855
      %v1903 = vmul.f32 1.0, %v1902
      %v1904 = vrcp.pop %v1856
      %v1905 = vmul.f32 1.0, %v1904
      %v1906 = vrcp.pop %v1857
      %v1907 = vmul.f32 1.0, %v1906
      %v1908 = vrcp.pop %v1858
      %v1909 = vmul.f32 1.0, %v1908
      %v1910 = vrcp.pop %v1859
      %v1911 = vmul.f32 1.0, %v1910
      %v1912 = vrcp.pop %v1860
      %v1913 = vmul.f32 1.0, %v1912
      %v1914 = vrcp.pop %v1861
      %v1915 = vmul.f32 1.0, %v1914
      %v1916 = vrcp.pop %v1862
      %v1917 = vmul.f32 1.0, %v1916
      %v1918 = vrcp.pop %v1863
      %v1919 = vmul.f32 1.0, %v1918
      %v1920 = vrcp.pop %v1864
      %v1921 = vmul.f32 1.0, %v1920
      %v1922 = vrcp.pop %v1865
      %v1923 = vmul.f32 1.0, %v1922
      %v1924 = vrcp.pop %v1866
      %v1925 = vmul.f32 1.0, %v1924
      %v1926 = vrcp.pop %v1867
      %v1927 = vmul.f32 1.0, %v1926
      %v1928 = vrcp.pop %v1868
      %v1929 = vmul.f32 1.0, %v1928
      %v1930 = vrcp.pop %v1869
      %v1931 = vmul.f32 1.0, %v1930
      %v1932 = vrcp.pop %v1870
      %v1933 = vmul.f32 1.0, %v1932
      %v1934 = vrcp.pop %v1871
      %v1935 = vmul.f32 1.0, %v1934
      %1936 = vst [vmem:[%s145] sm:$0xff] %v1873
      %1937 = vst [vmem:[%s145 + $0x8] sm:$0xff] %v1875
      %1938 = vst [vmem:[%s145 + $0x10] sm:$0xff] %v1877
      %1939 = vst [vmem:[%s145 + $0x18] sm:$0xff] %v1879
      %1940 = vst [vmem:[%s145 + $0x20] sm:$0xff] %v1881
      %1941 = vst [vmem:[%s145 + $0x28] sm:$0xff] %v1883
      %1942 = vst [vmem:[%s145 + $0x30] sm:$0xff] %v1885
      %1943 = vst [vmem:[%s145 + $0x38] sm:$0xff] %v1887
      %1944 = vst [vmem:[%s145 + $0x40] sm:$0xff] %v1889
      %1945 = vst [vmem:[%s145 + $0x48] sm:$0xff] %v1891
      %1946 = vst [vmem:[%s145 + $0x50] sm:$0xff] %v1893
      %1947 = vst [vmem:[%s145 + $0x58] sm:$0xff] %v1895
      %1948 = vst [vmem:[%s145 + $0x60] sm:$0xff] %v1897
      %1949 = vst [vmem:[%s145 + $0x68] sm:$0xff] %v1899
      %1950 = vst [vmem:[%s145 + $0x70] sm:$0xff] %v1901
      %1951 = vst [vmem:[%s145 + $0x78] sm:$0xff] %v1903
      %1952 = vst [vmem:[%s145 + $0x80] sm:$0xff] %v1905
      %1953 = vst [vmem:[%s145 + $0x88] sm:$0xff] %v1907
      %1954 = vst [vmem:[%s145 + $0x90] sm:$0xff] %v1909
      %1955 = vst [vmem:[%s145 + $0x98] sm:$0xff] %v1911
      %1956 = vst [vmem:[%s145 + $0xa0] sm:$0xff] %v1913
      %1957 = vst [vmem:[%s145 + $0xa8] sm:$0xff] %v1915
      %1958 = vst [vmem:[%s145 + $0xb0] sm:$0xff] %v1917
      %1959 = vst [vmem:[%s145 + $0xb8] sm:$0xff] %v1919
      %1960 = vst [vmem:[%s145 + $0xc0] sm:$0xff] %v1921
      %1961 = vst [vmem:[%s145 + $0xc8] sm:$0xff] %v1923
      %1962 = vst [vmem:[%s145 + $0xd0] sm:$0xff] %v1925
      %1963 = vst [vmem:[%s145 + $0xd8] sm:$0xff] %v1927
      %1964 = vst [vmem:[%s145 + $0xe0] sm:$0xff] %v1929
      %1965 = vst [vmem:[%s145 + $0xe8] sm:$0xff] %v1931
      %1966 = vst [vmem:[%s145 + $0xf0] sm:$0xff] %v1933
      %1967 = vst [vmem:[%s145 + $0xf8] sm:$0xff] %v1935
      %s1968 = smul.u32 32, %s13
      %p1969 = scmp.lt.s32.totalorder %s1968, 63
      %s1970 = scalar_select %p1969, %s1968, 63
      %s1971 = smul.addr %s1970, 8
      %s1972 = scalar_lea.vmem %s2, %s1971
      // Predicated region
      $region29: #{classifier_forward.1} parent=27 // pred_check
        %p1973 = pneg %p78
      $region30: #{classifier_forward.1} parent=27 // pred_check_branch
        %1975 = sbr.rel (%p1973) target = $region32
      $region31: #{classifier_forward.1} parent=27 // pred_region
        %s1976 = smul.u32 32, %s13
      $region32: #{classifier_forward.1} parent=27 // pred_fallthru
        _
    $region28: #{classifier_forward.1} parent=5 // pred_fallthru
      _
    %p1977 = scmp.le.s32.totalorder 2, %s8
    // Predicated region
    $region33: #{classifier_forward.1} parent=5 // pred_check
      %p1978 = pneg %p1977
    $region34: #{classifier_forward.1} parent=5 // pred_check_branch
      %1980 = sbr.rel (%p1978) target = $region36
    $region35: #{classifier_forward.1} parent=5 // pred_region
      %s1981 = ssub.s32 %s8, 2
      // Predicated region
      $region37: #{classifier_forward.1} parent=35 // pred_check
        %p1982 = pneg %p84
      $region38: #{classifier_forward.1} parent=35 // pred_check_branch
        %1984 = sbr.rel (%p1982) target = $region40
      $region39: #{classifier_forward.1} parent=35 // pred_region
        %s1985 = smul.u32 32, %s14
        %p1986 = scmp.lt.s32.totalorder %s1985, 63
        %s1987 = scalar_select %p1986, %s1985, 63
        %s1988 = smul.addr %s1987, 8
        %s1989 = scalar_lea.vmem %s2, %s1988
      $region40: #{classifier_forward.1} parent=35 // pred_fallthru
        _
    $region36: #{classifier_forward.1} parent=5 // pred_fallthru
      _
  $region6: #{classifier_forward.1} parent=0 // loop_footer
    %s12 = sadd.s32 1, %s8
  $region7: #{classifier_forward.1} parent=0 // loop_footer_branch
    %7 = sbr.rel target = $region3
  $region8: #{classifier_forward.1} parent=0 // loop_exit
    _

</llo_original>
